<compile_context>
chip_gen: v5e
topology: v5e:2x2
jax: 0.10.0
libtpu: 0.0.40
codegen_flags: <defaults>
</compile_context>

<pallas_src>
import functools
import math

import jax
import jax.numpy as jnp
from jax import lax
from jax.experimental import pallas as pl
from jax.experimental.pallas import tpu as pltpu

# Layer sizes of the NNPCAModel MLP.
LAYER_DIMS = [100, 50, 20, 10, 5, 2, 1]

_INV_SQRT2 = 1.0 / math.sqrt(2.0)


def _gelu_exact(v):
    # PyTorch nn.GELU() default is the exact erf formulation.
    return 0.5 * v * (1.0 + lax.erf(v * _INV_SQRT2))


def _mlp_kernel(x_ref,
                w0_ref, b0_ref, w1_ref, b1_ref, w2_ref, b2_ref,
                w3_ref, b3_ref, w4_ref, b4_ref, w5_ref, b5_ref,
                o_ref):
    # x: (block_b, 100).  All weights are (out, in); biases are (out, 1).
    x = x_ref[...].astype(jnp.float32)

    # Layer 0: contract x's feature dim with w0T's 'in' dim -> (50, block_b).
    # Activations stay in the transposed (features, block_b) orientation from
    # here on, so GELU is lane-dense over block_b.
    h = lax.dot_general(
        w0_ref[...], x,
        dimension_numbers=(((1,), (1,)), ((), ())),
        preferred_element_type=jnp.float32)
    h = _gelu_exact(h + b0_ref[...])

    # Hidden layers 1..4: (out, in) @ (in, block_b) -> (out, block_b), + GELU.
    for w_ref, b_ref in ((w1_ref, b1_ref), (w2_ref, b2_ref),
                         (w3_ref, b3_ref), (w4_ref, b4_ref)):
        h = lax.dot_general(
            w_ref[...], h,
            dimension_numbers=(((1,), (0,)), ((), ())),
            preferred_element_type=jnp.float32)
        h = _gelu_exact(h + b_ref[...])

    # Output layer: (1, 2) @ (2, block_b) -> (1, block_b), + Sigmoid.
    logits = lax.dot_general(
        w5_ref[...], h,
        dimension_numbers=(((1,), (0,)), ((), ())),
        preferred_element_type=jnp.float32)
    out_row = jax.nn.sigmoid(logits + b5_ref[...])        # (1, block_b)

    o_ref[...] = out_row[None].astype(o_ref.dtype)        # (1, 1, block_b)


@functools.partial(jax.jit, static_argnames=("block_b",))
def nn_pca_forward(x, params, *, block_b=2048):
    """x: [B, 100] float32. params: list of (W[in,out], b[1,out]) pairs."""
    B, F_in = x.shape
    assert F_in == LAYER_DIMS[0]

    # v7x has 2 TensorCores; "parallel" grid semantics only help with >= 2 grid
    # steps.  Clamp block_b so the batch splits into at least 2 tiles when it
    # can (harmless on single-TC v5e/v6e).
    half_rounded = ((pl.cdiv(B, 2) + 127) // 128) * 128
    block_b = min(block_b, max(128, half_rounded))
    block_b = max(8, block_b - block_b % 8)   # keep sublane-aligned batch tiles

    # Pad the batch to a multiple of block_b (padded rows are discarded below).
    padded_B = pl.cdiv(B, block_b) * block_b
    if padded_B != B:
        x = jnp.pad(x, ((0, padded_B - B), (0, 0)))
    num_blocks = padded_B // block_b

    # Pre-transpose every weight to (out, in) and bias to (out, 1) so the whole
    # network runs in the transposed orientation (lane-dense GELU + lane-dense
    # final store) with no in-kernel transposes.
    flat_params = []
    for w, b in params:
        flat_params.extend([w.T, b.T])

    # Weights/biases: whole-array resident in VMEM, single-buffered.  Only x
    # and the output slab are pipelined (double-buffered by BlockSpec).
    resident = pl.BlockSpec(memory_space=pltpu.MemorySpace.VMEM)
    in_specs = [pl.BlockSpec((block_b, F_in), lambda i: (i, 0))]
    in_specs += [resident] * len(flat_params)

    # Lane-dense output slab: one (1, 1, block_b) row per grid step; last two
    # block dims equal the full array dims -> unmasked wide stores.
    out_specs = pl.BlockSpec((1, 1, block_b), lambda i: (i, 0, 0))

    flops_per_row = 2 * sum(di * do for di, do in zip(LAYER_DIMS[:-1], LAYER_DIMS[1:]))
    param_bytes = 4 * sum(di * do + do for di, do in zip(LAYER_DIMS[:-1], LAYER_DIMS[1:]))
    cost = pl.CostEstimate(
        flops=flops_per_row * padded_B,
        transcendentals=6 * padded_B,
        bytes_accessed=4 * (F_in + 1) * padded_B + param_bytes,
    )

    out3d = pl.pallas_call(
        _mlp_kernel,
        out_shape=jax.ShapeDtypeStruct((num_blocks, 1, block_b), x.dtype),
        grid_spec=pltpu.PrefetchScalarGridSpec(
            num_scalar_prefetch=0,
            grid=(num_blocks,),
            in_specs=in_specs,
            out_specs=out_specs,
        ),
        compiler_params=pltpu.CompilerParams(
            dimension_semantics=("parallel",),
            # Plenty for block_b up to 8192; stays under v7x's smaller VMEM.
            vmem_limit_bytes=32 * 1024 * 1024,
        ),
        cost_estimate=cost,
    )(x, *flat_params)

    # Layout plumbing only: block i holds batch rows [i*block_b, (i+1)*block_b).
    return out3d.reshape(padded_B, 1)[:B]


def init_params(key):
    """Deterministic init matching the nn.Linear shapes of NNPCAModel.

    W is stored as [in, out] (so y = x @ W + b), b as [1, out]."""
    params = []
    for idx, (din, dout) in enumerate(zip(LAYER_DIMS[:-1], LAYER_DIMS[1:])):
        kw, kb, key = jax.random.split(jax.random.fold_in(key, idx), 3)
        bound = 1.0 / math.sqrt(din)  # PyTorch default uniform(-1/sqrt(in), 1/sqrt(in))
        w = jax.random.uniform(kw, (din, dout), jnp.float32, -bound, bound)
        b = jax.random.uniform(kb, (1, dout), jnp.float32, -bound, bound)
        params.append((w, b))
    return params


def reference_forward(x, params):
    h = x
    for i, (w, b) in enumerate(params):
        h = h @ w + b
        if i < len(params) - 1:
            h = 0.5 * h * (1.0 + lax.erf(h / math.sqrt(2.0)))
        else:
            h = jax.nn.sigmoid(h)
    return h


if __name__ == "__main__":
    key = jax.random.PRNGKey(0)
    kx, kp = jax.random.split(key)

    # Small demo shapes: ragged batch (exercises wrapper padding); the wrapper's
    # two-tile clamp yields 2 grid steps of block_b=128 here (feeds both TCs on
    # v7x).  Production default is block_b=2048.
    B = 200
    x = jax.random.normal(kx, (B, LAYER_DIMS[0]), dtype=jnp.float32)
    params = init_params(kp)

    out = nn_pca_forward(x, params, block_b=128)
    out = jax.block_until_ready(out)

    ref = reference_forward(x, params)
    assert out.shape == (B, 1), out.shape
    # Tolerance accounts for the reference's DEFAULT-precision (bf16-pass) XLA
    # dots vs. the kernel's in-Pallas f32 MXU matmuls; structural errors would
    # show up as O(0.1) deviations in the (0,1) sigmoid outputs.
    assert jnp.allclose(out, ref, atol=2e-3, rtol=1e-3), (
        float(jnp.max(jnp.abs(out - ref))))

    print("KERNEL_OK")
</pallas_src>

<mosaic_0001>
module attributes {stable_mosaic.version = 11 : i64} {
  func.func @_mlp_kernel(%arg0: i32, %arg1: memref<128x100xf32, #tpu.memory_space<vmem>>, %arg2: memref<50x100xf32, #tpu.memory_space<vmem>>, %arg3: memref<50x1xf32, #tpu.memory_space<vmem>>, %arg4: memref<20x50xf32, #tpu.memory_space<vmem>>, %arg5: memref<20x1xf32, #tpu.memory_space<vmem>>, %arg6: memref<10x20xf32, #tpu.memory_space<vmem>>, %arg7: memref<10x1xf32, #tpu.memory_space<vmem>>, %arg8: memref<5x10xf32, #tpu.memory_space<vmem>>, %arg9: memref<5x1xf32, #tpu.memory_space<vmem>>, %arg10: memref<2x5xf32, #tpu.memory_space<vmem>>, %arg11: memref<2x1xf32, #tpu.memory_space<vmem>>, %arg12: memref<1x2xf32, #tpu.memory_space<vmem>>, %arg13: memref<1x1xf32, #tpu.memory_space<vmem>>, %arg14: memref<1x1x128xf32, #tpu.memory_space<vmem>>) attributes {dimension_semantics = [#tpu.dimension_semantics<parallel>], iteration_bounds = array<i64: 2>, scalar_prefetch = 0 : i64, scratch_operands = 0 : i64, tpu.core_type = #tpu.core_type<tc>, window_params = [{transform_indices = @transform_0, window_bounds = array<i64: 128, 100>}, {pipeline_mode = #tpu.pipeline_mode<synchronous>, transform_indices = @transform_1, window_bounds = array<i64: 50, 100>}, {pipeline_mode = #tpu.pipeline_mode<synchronous>, transform_indices = @transform_2, window_bounds = array<i64: 50, 1>}, {pipeline_mode = #tpu.pipeline_mode<synchronous>, transform_indices = @transform_3, window_bounds = array<i64: 20, 50>}, {pipeline_mode = #tpu.pipeline_mode<synchronous>, transform_indices = @transform_4, window_bounds = array<i64: 20, 1>}, {pipeline_mode = #tpu.pipeline_mode<synchronous>, transform_indices = @transform_5, window_bounds = array<i64: 10, 20>}, {pipeline_mode = #tpu.pipeline_mode<synchronous>, transform_indices = @transform_6, window_bounds = array<i64: 10, 1>}, {pipeline_mode = #tpu.pipeline_mode<synchronous>, transform_indices = @transform_7, window_bounds = array<i64: 5, 10>}, {pipeline_mode = #tpu.pipeline_mode<synchronous>, transform_indices = @transform_8, window_bounds = array<i64: 5, 1>}, {pipeline_mode = #tpu.pipeline_mode<synchronous>, transform_indices = @transform_9, window_bounds = array<i64: 2, 5>}, {pipeline_mode = #tpu.pipeline_mode<synchronous>, transform_indices = @transform_10, window_bounds = array<i64: 2, 1>}, {pipeline_mode = #tpu.pipeline_mode<synchronous>, transform_indices = @transform_11, window_bounds = array<i64: 1, 2>}, {pipeline_mode = #tpu.pipeline_mode<synchronous>, transform_indices = @transform_12, window_bounds = array<i64: 1, 1>}, {transform_indices = @transform_13, window_bounds = array<i64: 1, 1, 128>}]} {
    %c0 = arith.constant 0 : index
    %c0_0 = arith.constant 0 : index
    %0 = vector.load %arg1[%c0, %c0_0] : memref<128x100xf32, #tpu.memory_space<vmem>>, vector<128x100xf32>
    %c0_1 = arith.constant 0 : index
    %c0_2 = arith.constant 0 : index
    %1 = vector.load %arg2[%c0_1, %c0_2] : memref<50x100xf32, #tpu.memory_space<vmem>>, vector<50x100xf32>
    %cst = arith.constant dense<0.000000e+00> : vector<50x128xf32>
    %2 = tpu.matmul %1, %0, %cst {dimension_numbers = #tpu.dot_dimension_numbers<[1], [1], [0], [0], [0, 0, 1, 0], [], []>} : vector<50x100xf32>, vector<128x100xf32>, vector<50x128xf32> -> vector<50x128xf32>
    %c0_3 = arith.constant 0 : index
    %c0_4 = arith.constant 0 : index
    %3 = vector.load %arg3[%c0_3, %c0_4] : memref<50x1xf32, #tpu.memory_space<vmem>>, vector<50x1xf32>
    %4 = vector.broadcast %3 : vector<50x1xf32> to vector<50x128xf32>
    %5 = arith.addf %2, %4 : vector<50x128xf32>
    %cst_5 = arith.constant 5.000000e-01 : f32
    %6 = vector.broadcast %cst_5 : f32 to vector<50x128xf32>
    %7 = arith.mulf %6, %5 : vector<50x128xf32>
    %cst_6 = arith.constant 0.707106769 : f32
    %8 = vector.broadcast %cst_6 : f32 to vector<50x128xf32>
    %9 = arith.mulf %5, %8 : vector<50x128xf32>
    %10 = math.erf %9 : vector<50x128xf32>
    %cst_7 = arith.constant 1.000000e+00 : f32
    %11 = vector.broadcast %cst_7 : f32 to vector<50x128xf32>
    %12 = arith.addf %11, %10 : vector<50x128xf32>
    %13 = arith.mulf %7, %12 : vector<50x128xf32>
    %c0_8 = arith.constant 0 : index
    %c0_9 = arith.constant 0 : index
    %14 = vector.load %arg4[%c0_8, %c0_9] : memref<20x50xf32, #tpu.memory_space<vmem>>, vector<20x50xf32>
    %cst_10 = arith.constant dense<0.000000e+00> : vector<20x128xf32>
    %15 = tpu.matmul %14, %13, %cst_10 {dimension_numbers = #tpu.dot_dimension_numbers<[1], [0], [0], [1], [0, 0, 1, 1], [], []>} : vector<20x50xf32>, vector<50x128xf32>, vector<20x128xf32> -> vector<20x128xf32>
    %c0_11 = arith.constant 0 : index
    %c0_12 = arith.constant 0 : index
    %16 = vector.load %arg5[%c0_11, %c0_12] : memref<20x1xf32, #tpu.memory_space<vmem>>, vector<20x1xf32>
    %17 = vector.broadcast %16 : vector<20x1xf32> to vector<20x128xf32>
    %18 = arith.addf %15, %17 : vector<20x128xf32>
    %cst_13 = arith.constant 5.000000e-01 : f32
    %19 = vector.broadcast %cst_13 : f32 to vector<20x128xf32>
    %20 = arith.mulf %19, %18 : vector<20x128xf32>
    %cst_14 = arith.constant 0.707106769 : f32
    %21 = vector.broadcast %cst_14 : f32 to vector<20x128xf32>
    %22 = arith.mulf %18, %21 : vector<20x128xf32>
    %23 = math.erf %22 : vector<20x128xf32>
    %cst_15 = arith.constant 1.000000e+00 : f32
    %24 = vector.broadcast %cst_15 : f32 to vector<20x128xf32>
    %25 = arith.addf %24, %23 : vector<20x128xf32>
    %26 = arith.mulf %20, %25 : vector<20x128xf32>
    %c0_16 = arith.constant 0 : index
    %c0_17 = arith.constant 0 : index
    %27 = vector.load %arg6[%c0_16, %c0_17] : memref<10x20xf32, #tpu.memory_space<vmem>>, vector<10x20xf32>
    %cst_18 = arith.constant dense<0.000000e+00> : vector<10x128xf32>
    %28 = tpu.matmul %27, %26, %cst_18 {dimension_numbers = #tpu.dot_dimension_numbers<[1], [0], [0], [1], [0, 0, 1, 1], [], []>} : vector<10x20xf32>, vector<20x128xf32>, vector<10x128xf32> -> vector<10x128xf32>
    %c0_19 = arith.constant 0 : index
    %c0_20 = arith.constant 0 : index
    %29 = vector.load %arg7[%c0_19, %c0_20] : memref<10x1xf32, #tpu.memory_space<vmem>>, vector<10x1xf32>
    %30 = vector.broadcast %29 : vector<10x1xf32> to vector<10x128xf32>
    %31 = arith.addf %28, %30 : vector<10x128xf32>
    %cst_21 = arith.constant 5.000000e-01 : f32
    %32 = vector.broadcast %cst_21 : f32 to vector<10x128xf32>
    %33 = arith.mulf %32, %31 : vector<10x128xf32>
    %cst_22 = arith.constant 0.707106769 : f32
    %34 = vector.broadcast %cst_22 : f32 to vector<10x128xf32>
    %35 = arith.mulf %31, %34 : vector<10x128xf32>
    %36 = math.erf %35 : vector<10x128xf32>
    %cst_23 = arith.constant 1.000000e+00 : f32
    %37 = vector.broadcast %cst_23 : f32 to vector<10x128xf32>
    %38 = arith.addf %37, %36 : vector<10x128xf32>
    %39 = arith.mulf %33, %38 : vector<10x128xf32>
    %c0_24 = arith.constant 0 : index
    %c0_25 = arith.constant 0 : index
    %40 = vector.load %arg8[%c0_24, %c0_25] : memref<5x10xf32, #tpu.memory_space<vmem>>, vector<5x10xf32>
    %cst_26 = arith.constant dense<0.000000e+00> : vector<5x128xf32>
    %41 = tpu.matmul %40, %39, %cst_26 {dimension_numbers = #tpu.dot_dimension_numbers<[1], [0], [0], [1], [0, 0, 1, 1], [], []>} : vector<5x10xf32>, vector<10x128xf32>, vector<5x128xf32> -> vector<5x128xf32>
    %c0_27 = arith.constant 0 : index
    %c0_28 = arith.constant 0 : index
    %42 = vector.load %arg9[%c0_27, %c0_28] : memref<5x1xf32, #tpu.memory_space<vmem>>, vector<5x1xf32>
    %43 = vector.broadcast %42 : vector<5x1xf32> to vector<5x128xf32>
    %44 = arith.addf %41, %43 : vector<5x128xf32>
    %cst_29 = arith.constant 5.000000e-01 : f32
    %45 = vector.broadcast %cst_29 : f32 to vector<5x128xf32>
    %46 = arith.mulf %45, %44 : vector<5x128xf32>
    %cst_30 = arith.constant 0.707106769 : f32
    %47 = vector.broadcast %cst_30 : f32 to vector<5x128xf32>
    %48 = arith.mulf %44, %47 : vector<5x128xf32>
    %49 = math.erf %48 : vector<5x128xf32>
    %cst_31 = arith.constant 1.000000e+00 : f32
    %50 = vector.broadcast %cst_31 : f32 to vector<5x128xf32>
    %51 = arith.addf %50, %49 : vector<5x128xf32>
    %52 = arith.mulf %46, %51 : vector<5x128xf32>
    %c0_32 = arith.constant 0 : index
    %c0_33 = arith.constant 0 : index
    %53 = vector.load %arg10[%c0_32, %c0_33] : memref<2x5xf32, #tpu.memory_space<vmem>>, vector<2x5xf32>
    %cst_34 = arith.constant dense<0.000000e+00> : vector<2x128xf32>
    %54 = tpu.matmul %53, %52, %cst_34 {dimension_numbers = #tpu.dot_dimension_numbers<[1], [0], [0], [1], [0, 0, 1, 1], [], []>} : vector<2x5xf32>, vector<5x128xf32>, vector<2x128xf32> -> vector<2x128xf32>
    %c0_35 = arith.constant 0 : index
    %c0_36 = arith.constant 0 : index
    %55 = vector.load %arg11[%c0_35, %c0_36] : memref<2x1xf32, #tpu.memory_space<vmem>>, vector<2x1xf32>
    %56 = vector.broadcast %55 : vector<2x1xf32> to vector<2x128xf32>
    %57 = arith.addf %54, %56 : vector<2x128xf32>
    %cst_37 = arith.constant 5.000000e-01 : f32
    %58 = vector.broadcast %cst_37 : f32 to vector<2x128xf32>
    %59 = arith.mulf %58, %57 : vector<2x128xf32>
    %cst_38 = arith.constant 0.707106769 : f32
    %60 = vector.broadcast %cst_38 : f32 to vector<2x128xf32>
    %61 = arith.mulf %57, %60 : vector<2x128xf32>
    %62 = math.erf %61 : vector<2x128xf32>
    %cst_39 = arith.constant 1.000000e+00 : f32
    %63 = vector.broadcast %cst_39 : f32 to vector<2x128xf32>
    %64 = arith.addf %63, %62 : vector<2x128xf32>
    %65 = arith.mulf %59, %64 : vector<2x128xf32>
    %c0_40 = arith.constant 0 : index
    %c0_41 = arith.constant 0 : index
    %66 = vector.load %arg12[%c0_40, %c0_41] : memref<1x2xf32, #tpu.memory_space<vmem>>, vector<1x2xf32>
    %cst_42 = arith.constant dense<0.000000e+00> : vector<1x128xf32>
    %67 = tpu.matmul %66, %65, %cst_42 {dimension_numbers = #tpu.dot_dimension_numbers<[1], [0], [0], [1], [0, 0, 1, 1], [], []>} : vector<1x2xf32>, vector<2x128xf32>, vector<1x128xf32> -> vector<1x128xf32>
    %c0_43 = arith.constant 0 : index
    %c0_44 = arith.constant 0 : index
    %68 = vector.load %arg13[%c0_43, %c0_44] : memref<1x1xf32, #tpu.memory_space<vmem>>, vector<1x1xf32>
    %69 = vector.broadcast %68 : vector<1x1xf32> to vector<1x128xf32>
    %70 = arith.addf %67, %69 : vector<1x128xf32>
    %71 = arith.negf %70 : vector<1x128xf32>
    %72 = math.exp %71 : vector<1x128xf32>
    %cst_45 = arith.constant 1.000000e+00 : f32
    %73 = vector.broadcast %cst_45 : f32 to vector<1x128xf32>
    %74 = arith.addf %73, %72 : vector<1x128xf32>
    %75 = arith.divf %73, %74 : vector<1x128xf32>
    %76 = vector.shape_cast %75 : vector<1x128xf32> to vector<1x1x128xf32>
    %c0_46 = arith.constant 0 : index
    %c0_47 = arith.constant 0 : index
    %c0_48 = arith.constant 0 : index
    %77 = vector.load %arg14[%c0_46, %c0_47, %c0_48] : memref<1x1x128xf32, #tpu.memory_space<vmem>>, vector<1x1x128xf32>
    tpu.vector_store %arg14[%c0_46, %c0_47, %c0_48], %76 {strides = array<i32>} : memref<1x1x128xf32, #tpu.memory_space<vmem>>, vector<1x1x128xf32>,
    return
  }
  func.func @transform_0(%arg0: i32) -> (i32, i32) {
    %c0_i32 = arith.constant 0 : i32
    %c0_i32_0 = arith.constant 0 : i32
    return %arg0, %c0_i32 : i32, i32
  }
  func.func @transform_1(%arg0: i32) -> (i32, i32) {
    %c0_i32 = arith.constant 0 : i32
    %c0_i32_0 = arith.constant 0 : i32
    %c0_i32_1 = arith.constant 0 : i32
    return %c0_i32, %c0_i32_0 : i32, i32
  }
  func.func @transform_2(%arg0: i32) -> (i32, i32) {
    %c0_i32 = arith.constant 0 : i32
    %c0_i32_0 = arith.constant 0 : i32
    %c0_i32_1 = arith.constant 0 : i32
    return %c0_i32, %c0_i32_0 : i32, i32
  }
  func.func @transform_3(%arg0: i32) -> (i32, i32) {
    %c0_i32 = arith.constant 0 : i32
    %c0_i32_0 = arith.constant 0 : i32
    %c0_i32_1 = arith.constant 0 : i32
    return %c0_i32, %c0_i32_0 : i32, i32
  }
  func.func @transform_4(%arg0: i32) -> (i32, i32) {
    %c0_i32 = arith.constant 0 : i32
    %c0_i32_0 = arith.constant 0 : i32
    %c0_i32_1 = arith.constant 0 : i32
    return %c0_i32, %c0_i32_0 : i32, i32
  }
  func.func @transform_5(%arg0: i32) -> (i32, i32) {
    %c0_i32 = arith.constant 0 : i32
    %c0_i32_0 = arith.constant 0 : i32
    %c0_i32_1 = arith.constant 0 : i32
    return %c0_i32, %c0_i32_0 : i32, i32
  }
  func.func @transform_6(%arg0: i32) -> (i32, i32) {
    %c0_i32 = arith.constant 0 : i32
    %c0_i32_0 = arith.constant 0 : i32
    %c0_i32_1 = arith.constant 0 : i32
    return %c0_i32, %c0_i32_0 : i32, i32
  }
  func.func @transform_7(%arg0: i32) -> (i32, i32) {
    %c0_i32 = arith.constant 0 : i32
    %c0_i32_0 = arith.constant 0 : i32
    %c0_i32_1 = arith.constant 0 : i32
    return %c0_i32, %c0_i32_0 : i32, i32
  }
  func.func @transform_8(%arg0: i32) -> (i32, i32) {
    %c0_i32 = arith.constant 0 : i32
    %c0_i32_0 = arith.constant 0 : i32
    %c0_i32_1 = arith.constant 0 : i32
    return %c0_i32, %c0_i32_0 : i32, i32
  }
  func.func @transform_9(%arg0: i32) -> (i32, i32) {
    %c0_i32 = arith.constant 0 : i32
    %c0_i32_0 = arith.constant 0 : i32
    %c0_i32_1 = arith.constant 0 : i32
    return %c0_i32, %c0_i32_0 : i32, i32
  }
  func.func @transform_10(%arg0: i32) -> (i32, i32) {
    %c0_i32 = arith.constant 0 : i32
    %c0_i32_0 = arith.constant 0 : i32
    %c0_i32_1 = arith.constant 0 : i32
    return %c0_i32, %c0_i32_0 : i32, i32
  }
  func.func @transform_11(%arg0: i32) -> (i32, i32) {
    %c0_i32 = arith.constant 0 : i32
    %c0_i32_0 = arith.constant 0 : i32
    %c0_i32_1 = arith.constant 0 : i32
    return %c0_i32, %c0_i32_0 : i32, i32
  }
  func.func @transform_12(%arg0: i32) -> (i32, i32) {
    %c0_i32 = arith.constant 0 : i32
    %c0_i32_0 = arith.constant 0 : i32
    %c0_i32_1 = arith.constant 0 : i32
    return %c0_i32, %c0_i32_0 : i32, i32
  }
  func.func @transform_13(%arg0: i32) -> (i32, i32, i32) {
    %c0_i32 = arith.constant 0 : i32
    %c0_i32_0 = arith.constant 0 : i32
    %c0_i32_1 = arith.constant 0 : i32
    return %arg0, %c0_i32, %c0_i32_0 : i32, i32, i32
  }
}

</mosaic_0001>

<llo_original>
// kernel: nn_pca_forward.1
$region0: #{nn_pca_forward.1}
  #allocation0 [shape = 'u32[]', space=smem, size = 0x4, offset = 0x4, fixed_abs, tag = 'smem constant byte address 0x4 - core index']
  #allocation1 [shape = 'u32[72,128]{1,0:T(1,128)}', space=vmem, size = 0x9000, scoped, tag = 'internal scratch']
  #allocation2 [shape = 'f32[1,1]{1,0:T(1,128)S(1)}', space=vmem, size = 0x200, scoped, tag = 'scoped memory for nn_pca_forward.1']
  %s0 = inlined_call_operand.vmem [shape: f32[256,100], index: 0, kind: input, shape index: {}]
  %s1 = inlined_call_operand.vmem [shape: f32[50,100], index: 1, kind: input, shape index: {}]
  %s2 = inlined_call_operand.vmem [shape: f32[50,1], index: 2, kind: input, shape index: {}]
  %s3 = inlined_call_operand.vmem [shape: f32[20,50], index: 3, kind: input, shape index: {}]
  %s4 = inlined_call_operand.vmem [shape: f32[20,1], index: 4, kind: input, shape index: {}]
  %s5 = inlined_call_operand.vmem [shape: f32[10,20], index: 5, kind: input, shape index: {}]
  %s6 = inlined_call_operand.vmem [shape: f32[10,1], index: 6, kind: input, shape index: {}]
  %s7 = inlined_call_operand.vmem [shape: f32[5,10], index: 7, kind: input, shape index: {}]
  %s8 = inlined_call_operand.vmem [shape: f32[5,1], index: 8, kind: input, shape index: {}]
  %s9 = inlined_call_operand.vmem [shape: f32[2,5], index: 9, kind: input, shape index: {}]
  %s10 = inlined_call_operand.vmem [shape: f32[2,1], index: 10, kind: input, shape index: {}]
  %s11 = inlined_call_operand.vmem [shape: f32[1,2], index: 11, kind: input, shape index: {}]
  %s12 = inlined_call_operand.<no memory space> [shape: f32[1,1], index: 12, kind: input, shape index: {}]
  %s13 = inlined_call_operand.hbm [shape: f32[2,1,128], index: 13, kind: output, shape index: {}]
  %s14 = sld [smem:[#allocation0]]
  $region85: #{nn_pca_forward.1} parent=0
    _
  %s16 = ssub.s32 1, %s14
  %s17 = scalar_select 0, %s16, %s14
  %v18 = vstv %s12
  %19 = vst [vmem:[#allocation2] sm:$0x1] %v18
  $region1: #{nn_pca_forward.1} parent=0
    #allocation3 [shape = 'u8[1024]{0}', space=vmem, size = 0x400, scoped, tag = 'output window, operand 0']
    #allocation4 [shape = 's32[2]{0}', space=sflag, size = 0x8, scoped, tag = 'scoped memory for nn_pca_forward.1']
    %20 = vsyncpa [#allocation4], 0
    %s21 = scalar_lea.sflag [#allocation4], 1
    %22 = vsyncpa %s21, 0
    loop: start=0, step=1, limit=4
    $region2: #{nn_pca_forward.1} parent=1 // loop_pre_header
      _
    $region3: #{nn_pca_forward.1} parent=1 // loop_header
      %s24 = sphi 0, %s28
      %p25 = scmp.ge.s32.totalorder %s24, 4
      %s34 = sphi 0, %s36
      %s37 = sphi 0, %s34
      %s38 = sphi 0, %s37
      %s54 = sphi 0, %s38
      %s58 = sphi 0, %s58
      %s60 = sphi 0, %s58
      %s61 = sphi 0, %s60
      %s75 = sphi 0, %s61
      %s79 = sphi 0, %s79
      %s81 = sphi 0, %s79
      %s82 = sphi 0, %s81
      %s96 = sphi 0, %s82
      %s100 = sphi 0, %s100
      %s102 = sphi 0, %s100
      %s103 = sphi 0, %s102
      %s117 = sphi 0, %s103
      %s121 = sphi 0, %s121
      %s123 = sphi 0, %s121
      %s124 = sphi 0, %s123
      %s138 = sphi 0, %s124
      %s142 = sphi 0, %s142
      %s144 = sphi 0, %s142
      %s145 = sphi 0, %s144
      %s159 = sphi 0, %s145
      %s163 = sphi 0, %s163
      %s165 = sphi 0, %s163
      %s166 = sphi 0, %s165
      %s180 = sphi 0, %s166
      %s184 = sphi 0, %s184
      %s186 = sphi 0, %s184
      %s187 = sphi 0, %s186
      %s201 = sphi 0, %s187
      %s205 = sphi 0, %s205
      %s207 = sphi 0, %s205
      %s208 = sphi 0, %s207
      %s222 = sphi 0, %s208
      %s226 = sphi 0, %s226
      %s228 = sphi 0, %s226
      %s229 = sphi 0, %s228
      %s243 = sphi 0, %s229
      %s247 = sphi 0, %s247
      %s249 = sphi 0, %s247
      %s250 = sphi 0, %s249
      %s264 = sphi 0, %s250
      %s268 = sphi 0, %s268
      %s270 = sphi 0, %s268
      %s271 = sphi 0, %s270
      %s285 = sphi 0, %s271
      %s289 = sphi 0, %s289
      %s291 = sphi 0, %s289
      %s292 = sphi 0, %s291
      %s306 = sphi 0, %s292
      %s312 = sphi 0, %s314
      %s315 = sphi 0, %s312
      %s316 = sphi 0, %s315
      %s332 = sphi 0, %s316
    $region4: #{nn_pca_forward.1} parent=1 // loop_header_branch
      %27 = sbr.rel (%p25) target = $region8
    $region5: #{nn_pca_forward.1} parent=1 // loop_body
      %s29 = ssub.s32 %s24, 1
      %s30 = ssub.s32 %s24, 2
      %s31 = sadd.s32 %s24, 1
      %s32 = ssub.s32 %s24, %s31
      %p33 = scmp.eq.s32.totalorder %s32, 0
      %s35 = sadd.s32 %s34, 1
      %s36 = scalar_select %p33, %s34, %s35
      %p39 = pneg %p33
      %p40 = scmp.eq.s32.totalorder %s24, 1
      %p41 = por %p39, %p40
      %p42 = scmp.ne.s32.totalorder %s34, %s37
      %p43 = scmp.eq.s32.totalorder %s24, 0
      %p44 = por %p42, %p43
      %p45 = scmp.ne.s32.totalorder %s34, %s37
      %p46 = scmp.eq.s32.totalorder %s29, 1
      %p47 = por %p45, %p46
      %p48 = scmp.ne.s32.totalorder %s37, %s38
      %p49 = scmp.eq.s32.totalorder %s29, 0
      %p50 = por %p48, %p49
      %p51 = scmp.ne.s32.totalorder %s37, %s38
      %p52 = scmp.eq.s32.totalorder %s30, 1
      %p53 = por %p51, %p52
      %p55 = scmp.ne.s32.totalorder %s38, %s54
      %p56 = scmp.eq.s32.totalorder %s30, 0
      %p57 = por %p55, %p56
      %s59 = sadd.s32 %s58, 1
      %p62 = scmp.eq.s32.totalorder %s24, 1
      %p63 = scmp.ne.s32.totalorder %s58, %s60
      %p64 = scmp.eq.s32.totalorder %s24, 0
      %p65 = por %p63, %p64
      %p66 = scmp.ne.s32.totalorder %s58, %s60
      %p67 = scmp.eq.s32.totalorder %s29, 1
      %p68 = por %p66, %p67
      %p69 = scmp.ne.s32.totalorder %s60, %s61
      %p70 = scmp.eq.s32.totalorder %s29, 0
      %p71 = por %p69, %p70
      %p72 = scmp.ne.s32.totalorder %s60, %s61
      %p73 = scmp.eq.s32.totalorder %s30, 1
      %p74 = por %p72, %p73
      %p76 = scmp.ne.s32.totalorder %s61, %s75
      %p77 = scmp.eq.s32.totalorder %s30, 0
      %p78 = por %p76, %p77
      %s80 = sadd.s32 %s79, 1
      %p83 = scmp.eq.s32.totalorder %s24, 1
      %p84 = scmp.ne.s32.totalorder %s79, %s81
      %p85 = scmp.eq.s32.totalorder %s24, 0
      %p86 = por %p84, %p85
      %p87 = scmp.ne.s32.totalorder %s79, %s81
      %p88 = scmp.eq.s32.totalorder %s29, 1
      %p89 = por %p87, %p88
      %p90 = scmp.ne.s32.totalorder %s81, %s82
      %p91 = scmp.eq.s32.totalorder %s29, 0
      %p92 = por %p90, %p91
      %p93 = scmp.ne.s32.totalorder %s81, %s82
      %p94 = scmp.eq.s32.totalorder %s30, 1
      %p95 = por %p93, %p94
      %p97 = scmp.ne.s32.totalorder %s82, %s96
      %p98 = scmp.eq.s32.totalorder %s30, 0
      %p99 = por %p97, %p98
      %s101 = sadd.s32 %s100, 1
      %p104 = scmp.eq.s32.totalorder %s24, 1
      %p105 = scmp.ne.s32.totalorder %s100, %s102
      %p106 = scmp.eq.s32.totalorder %s24, 0
      %p107 = por %p105, %p106
      %p108 = scmp.ne.s32.totalorder %s100, %s102
      %p109 = scmp.eq.s32.totalorder %s29, 1
      %p110 = por %p108, %p109
      %p111 = scmp.ne.s32.totalorder %s102, %s103
      %p112 = scmp.eq.s32.totalorder %s29, 0
      %p113 = por %p111, %p112
      %p114 = scmp.ne.s32.totalorder %s102, %s103
      %p115 = scmp.eq.s32.totalorder %s30, 1
      %p116 = por %p114, %p115
      %p118 = scmp.ne.s32.totalorder %s103, %s117
      %p119 = scmp.eq.s32.totalorder %s30, 0
      %p120 = por %p118, %p119
      %s122 = sadd.s32 %s121, 1
      %p125 = scmp.eq.s32.totalorder %s24, 1
      %p126 = scmp.ne.s32.totalorder %s121, %s123
      %p127 = scmp.eq.s32.totalorder %s24, 0
      %p128 = por %p126, %p127
      %p129 = scmp.ne.s32.totalorder %s121, %s123
      %p130 = scmp.eq.s32.totalorder %s29, 1
      %p131 = por %p129, %p130
      %p132 = scmp.ne.s32.totalorder %s123, %s124
      %p133 = scmp.eq.s32.totalorder %s29, 0
      %p134 = por %p132, %p133
      %p135 = scmp.ne.s32.totalorder %s123, %s124
      %p136 = scmp.eq.s32.totalorder %s30, 1
      %p137 = por %p135, %p136
      %p139 = scmp.ne.s32.totalorder %s124, %s138
      %p140 = scmp.eq.s32.totalorder %s30, 0
      %p141 = por %p139, %p140
      %s143 = sadd.s32 %s142, 1
      %p146 = scmp.eq.s32.totalorder %s24, 1
      %p147 = scmp.ne.s32.totalorder %s142, %s144
      %p148 = scmp.eq.s32.totalorder %s24, 0
      %p149 = por %p147, %p148
      %p150 = scmp.ne.s32.totalorder %s142, %s144
      %p151 = scmp.eq.s32.totalorder %s29, 1
      %p152 = por %p150, %p151
      %p153 = scmp.ne.s32.totalorder %s144, %s145
      %p154 = scmp.eq.s32.totalorder %s29, 0
      %p155 = por %p153, %p154
      %p156 = scmp.ne.s32.totalorder %s144, %s145
      %p157 = scmp.eq.s32.totalorder %s30, 1
      %p158 = por %p156, %p157
      %p160 = scmp.ne.s32.totalorder %s145, %s159
      %p161 = scmp.eq.s32.totalorder %s30, 0
      %p162 = por %p160, %p161
      %s164 = sadd.s32 %s163, 1
      %p167 = scmp.eq.s32.totalorder %s24, 1
      %p168 = scmp.ne.s32.totalorder %s163, %s165
      %p169 = scmp.eq.s32.totalorder %s24, 0
      %p170 = por %p168, %p169
      %p171 = scmp.ne.s32.totalorder %s163, %s165
      %p172 = scmp.eq.s32.totalorder %s29, 1
      %p173 = por %p171, %p172
      %p174 = scmp.ne.s32.totalorder %s165, %s166
      %p175 = scmp.eq.s32.totalorder %s29, 0
      %p176 = por %p174, %p175
      %p177 = scmp.ne.s32.totalorder %s165, %s166
      %p178 = scmp.eq.s32.totalorder %s30, 1
      %p179 = por %p177, %p178
      %p181 = scmp.ne.s32.totalorder %s166, %s180
      %p182 = scmp.eq.s32.totalorder %s30, 0
      %p183 = por %p181, %p182
      %s185 = sadd.s32 %s184, 1
      %p188 = scmp.eq.s32.totalorder %s24, 1
      %p189 = scmp.ne.s32.totalorder %s184, %s186
      %p190 = scmp.eq.s32.totalorder %s24, 0
      %p191 = por %p189, %p190
      %p192 = scmp.ne.s32.totalorder %s184, %s186
      %p193 = scmp.eq.s32.totalorder %s29, 1
      %p194 = por %p192, %p193
      %p195 = scmp.ne.s32.totalorder %s186, %s187
      %p196 = scmp.eq.s32.totalorder %s29, 0
      %p197 = por %p195, %p196
      %p198 = scmp.ne.s32.totalorder %s186, %s187
      %p199 = scmp.eq.s32.totalorder %s30, 1
      %p200 = por %p198, %p199
      %p202 = scmp.ne.s32.totalorder %s187, %s201
      %p203 = scmp.eq.s32.totalorder %s30, 0
      %p204 = por %p202, %p203
      %s206 = sadd.s32 %s205, 1
      %p209 = scmp.eq.s32.totalorder %s24, 1
      %p210 = scmp.ne.s32.totalorder %s205, %s207
      %p211 = scmp.eq.s32.totalorder %s24, 0
      %p212 = por %p210, %p211
      %p213 = scmp.ne.s32.totalorder %s205, %s207
      %p214 = scmp.eq.s32.totalorder %s29, 1
      %p215 = por %p213, %p214
      %p216 = scmp.ne.s32.totalorder %s207, %s208
      %p217 = scmp.eq.s32.totalorder %s29, 0
      %p218 = por %p216, %p217
      %p219 = scmp.ne.s32.totalorder %s207, %s208
      %p220 = scmp.eq.s32.totalorder %s30, 1
      %p221 = por %p219, %p220
      %p223 = scmp.ne.s32.totalorder %s208, %s222
      %p224 = scmp.eq.s32.totalorder %s30, 0
      %p225 = por %p223, %p224
      %s227 = sadd.s32 %s226, 1
      %p230 = scmp.eq.s32.totalorder %s24, 1
      %p231 = scmp.ne.s32.totalorder %s226, %s228
      %p232 = scmp.eq.s32.totalorder %s24, 0
      %p233 = por %p231, %p232
      %p234 = scmp.ne.s32.totalorder %s226, %s228
      %p235 = scmp.eq.s32.totalorder %s29, 1
      %p236 = por %p234, %p235
      %p237 = scmp.ne.s32.totalorder %s228, %s229
      %p238 = scmp.eq.s32.totalorder %s29, 0
      %p239 = por %p237, %p238
      %p240 = scmp.ne.s32.totalorder %s228, %s229
      %p241 = scmp.eq.s32.totalorder %s30, 1
      %p242 = por %p240, %p241
      %p244 = scmp.ne.s32.totalorder %s229, %s243
      %p245 = scmp.eq.s32.totalorder %s30, 0
      %p246 = por %p244, %p245
      %s248 = sadd.s32 %s247, 1
      %p251 = scmp.eq.s32.totalorder %s24, 1
      %p252 = scmp.ne.s32.totalorder %s247, %s249
      %p253 = scmp.eq.s32.totalorder %s24, 0
      %p254 = por %p252, %p253
      %p255 = scmp.ne.s32.totalorder %s247, %s249
      %p256 = scmp.eq.s32.totalorder %s29, 1
      %p257 = por %p255, %p256
      %p258 = scmp.ne.s32.totalorder %s249, %s250
      %p259 = scmp.eq.s32.totalorder %s29, 0
      %p260 = por %p258, %p259
      %p261 = scmp.ne.s32.totalorder %s249, %s250
      %p262 = scmp.eq.s32.totalorder %s30, 1
      %p263 = por %p261, %p262
      %p265 = scmp.ne.s32.totalorder %s250, %s264
      %p266 = scmp.eq.s32.totalorder %s30, 0
      %p267 = por %p265, %p266
      %s269 = sadd.s32 %s268, 1
      %p272 = scmp.eq.s32.totalorder %s24, 1
      %p273 = scmp.ne.s32.totalorder %s268, %s270
      %p274 = scmp.eq.s32.totalorder %s24, 0
      %p275 = por %p273, %p274
      %p276 = scmp.ne.s32.totalorder %s268, %s270
      %p277 = scmp.eq.s32.totalorder %s29, 1
      %p278 = por %p276, %p277
      %p279 = scmp.ne.s32.totalorder %s270, %s271
      %p280 = scmp.eq.s32.totalorder %s29, 0
      %p281 = por %p279, %p280
      %p282 = scmp.ne.s32.totalorder %s270, %s271
      %p283 = scmp.eq.s32.totalorder %s30, 1
      %p284 = por %p282, %p283
      %p286 = scmp.ne.s32.totalorder %s271, %s285
      %p287 = scmp.eq.s32.totalorder %s30, 0
      %p288 = por %p286, %p287
      %s290 = sadd.s32 %s289, 1
      %p293 = scmp.eq.s32.totalorder %s24, 1
      %p294 = scmp.ne.s32.totalorder %s289, %s291
      %p295 = scmp.eq.s32.totalorder %s24, 0
      %p296 = por %p294, %p295
      %p297 = scmp.ne.s32.totalorder %s289, %s291
      %p298 = scmp.eq.s32.totalorder %s29, 1
      %p299 = por %p297, %p298
      %p300 = scmp.ne.s32.totalorder %s291, %s292
      %p301 = scmp.eq.s32.totalorder %s29, 0
      %p302 = por %p300, %p301
      %p303 = scmp.ne.s32.totalorder %s291, %s292
      %p304 = scmp.eq.s32.totalorder %s30, 1
      %p305 = por %p303, %p304
      %p307 = scmp.ne.s32.totalorder %s292, %s306
      %p308 = scmp.eq.s32.totalorder %s30, 0
      %p309 = por %p307, %p308
      %s310 = ssub.s32 %s24, %s31
      %p311 = scmp.eq.s32.totalorder %s310, 0
      %s313 = sadd.s32 %s312, 1
      %s314 = scalar_select %p311, %s312, %s313
      %p317 = pneg %p311
      %p318 = scmp.eq.s32.totalorder %s24, 1
      %p319 = por %p317, %p318
      %p320 = scmp.ne.s32.totalorder %s312, %s315
      %p321 = scmp.eq.s32.totalorder %s24, 0
      %p322 = por %p320, %p321
      %p323 = scmp.ne.s32.totalorder %s312, %s315
      %p324 = scmp.eq.s32.totalorder %s29, 1
      %p325 = por %p323, %p324
      %p326 = scmp.ne.s32.totalorder %s315, %s316
      %p327 = scmp.eq.s32.totalorder %s29, 0
      %p328 = por %p326, %p327
      %p329 = scmp.ne.s32.totalorder %s315, %s316
      %p330 = scmp.eq.s32.totalorder %s30, 1
      %p331 = por %p329, %p330
      %p333 = scmp.ne.s32.totalorder %s316, %s332
      %p334 = scmp.eq.s32.totalorder %s30, 0
      %p335 = por %p333, %p334
      %p336 = scmp.le.s32.totalorder 1, %s24
      %p337 = scmp.lt.s32.totalorder %s24, 3
      %p338 = pnand %p336, %p337
      %p339 = pneg %p338
      // Predicated region
      $region9: #{nn_pca_forward.1} parent=5 // pred_check
        _
      $region10: #{nn_pca_forward.1} parent=5 // pred_check_branch
        %341 = sbr.rel (%p338) target = $region12
      $region11: #{nn_pca_forward.1} parent=5 // pred_region
        %s342 = ssub.s32 %s24, 1
        // Predicated region
        $region13: #{nn_pca_forward.1} parent=11 // pred_check
          %p343 = pneg %p71
        $region14: #{nn_pca_forward.1} parent=11 // pred_check_branch
          %345 = sbr.rel (%p343) target = $region16
        $region15: #{nn_pca_forward.1} parent=11 // pred_region
          _
        $region16: #{nn_pca_forward.1} parent=11 // pred_fallthru
          _
        // Predicated region
        $region17: #{nn_pca_forward.1} parent=11 // pred_check
          %p346 = pneg %p92
        $region18: #{nn_pca_forward.1} parent=11 // pred_check_branch
          %348 = sbr.rel (%p346) target = $region20
        $region19: #{nn_pca_forward.1} parent=11 // pred_region
          _
        $region20: #{nn_pca_forward.1} parent=11 // pred_fallthru
          _
        // Predicated region
        $region21: #{nn_pca_forward.1} parent=11 // pred_check
          %p349 = pneg %p113
        $region22: #{nn_pca_forward.1} parent=11 // pred_check_branch
          %351 = sbr.rel (%p349) target = $region24
        $region23: #{nn_pca_forward.1} parent=11 // pred_region
          _
        $region24: #{nn_pca_forward.1} parent=11 // pred_fallthru
          _
        // Predicated region
        $region25: #{nn_pca_forward.1} parent=11 // pred_check
          %p352 = pneg %p134
        $region26: #{nn_pca_forward.1} parent=11 // pred_check_branch
          %354 = sbr.rel (%p352) target = $region28
        $region27: #{nn_pca_forward.1} parent=11 // pred_region
          _
        $region28: #{nn_pca_forward.1} parent=11 // pred_fallthru
          _
        // Predicated region
        $region29: #{nn_pca_forward.1} parent=11 // pred_check
          %p355 = pneg %p155
        $region30: #{nn_pca_forward.1} parent=11 // pred_check_branch
          %357 = sbr.rel (%p355) target = $region32
        $region31: #{nn_pca_forward.1} parent=11 // pred_region
          _
        $region32: #{nn_pca_forward.1} parent=11 // pred_fallthru
          _
        // Predicated region
        $region33: #{nn_pca_forward.1} parent=11 // pred_check
          %p358 = pneg %p176
        $region34: #{nn_pca_forward.1} parent=11 // pred_check_branch
          %360 = sbr.rel (%p358) target = $region36
        $region35: #{nn_pca_forward.1} parent=11 // pred_region
          _
        $region36: #{nn_pca_forward.1} parent=11 // pred_fallthru
          _
        // Predicated region
        $region37: #{nn_pca_forward.1} parent=11 // pred_check
          %p361 = pneg %p197
        $region38: #{nn_pca_forward.1} parent=11 // pred_check_branch
          %363 = sbr.rel (%p361) target = $region40
        $region39: #{nn_pca_forward.1} parent=11 // pred_region
          _
        $region40: #{nn_pca_forward.1} parent=11 // pred_fallthru
          _
        // Predicated region
        $region41: #{nn_pca_forward.1} parent=11 // pred_check
          %p364 = pneg %p218
        $region42: #{nn_pca_forward.1} parent=11 // pred_check_branch
          %366 = sbr.rel (%p364) target = $region44
        $region43: #{nn_pca_forward.1} parent=11 // pred_region
          _
        $region44: #{nn_pca_forward.1} parent=11 // pred_fallthru
          _
        // Predicated region
        $region45: #{nn_pca_forward.1} parent=11 // pred_check
          %p367 = pneg %p239
        $region46: #{nn_pca_forward.1} parent=11 // pred_check_branch
          %369 = sbr.rel (%p367) target = $region48
        $region47: #{nn_pca_forward.1} parent=11 // pred_region
          _
        $region48: #{nn_pca_forward.1} parent=11 // pred_fallthru
          _
        // Predicated region
        $region49: #{nn_pca_forward.1} parent=11 // pred_check
          %p370 = pneg %p260
        $region50: #{nn_pca_forward.1} parent=11 // pred_check_branch
          %372 = sbr.rel (%p370) target = $region52
        $region51: #{nn_pca_forward.1} parent=11 // pred_region
          _
        $region52: #{nn_pca_forward.1} parent=11 // pred_fallthru
          _
        // Predicated region
        $region53: #{nn_pca_forward.1} parent=11 // pred_check
          %p373 = pneg %p281
        $region54: #{nn_pca_forward.1} parent=11 // pred_check_branch
          %375 = sbr.rel (%p373) target = $region56
        $region55: #{nn_pca_forward.1} parent=11 // pred_region
          _
        $region56: #{nn_pca_forward.1} parent=11 // pred_fallthru
          _
        // Predicated region
        $region57: #{nn_pca_forward.1} parent=11 // pred_check
          %p376 = pneg %p302
        $region58: #{nn_pca_forward.1} parent=11 // pred_check_branch
          %378 = sbr.rel (%p376) target = $region60
        $region59: #{nn_pca_forward.1} parent=11 // pred_region
          _
        $region60: #{nn_pca_forward.1} parent=11 // pred_fallthru
          _
      $region12: #{nn_pca_forward.1} parent=5 // pred_fallthru
        _
      %p379 = scmp.lt.s32.totalorder %s24, 2
      // Predicated region
      $region61: #{nn_pca_forward.1} parent=5 // pred_check
        %p380 = pneg %p379
      $region62: #{nn_pca_forward.1} parent=5 // pred_check_branch
        %382 = sbr.rel (%p380) target = $region64
      $region63: #{nn_pca_forward.1} parent=5 // pred_region
        // Predicated region
        $region65: #{nn_pca_forward.1} parent=63 // pred_check
          %p383 = pneg %p44
        $region66: #{nn_pca_forward.1} parent=63 // pred_check_branch
          %385 = sbr.rel (%p383) target = $region68
        $region67: #{nn_pca_forward.1} parent=63 // pred_region
          %s386 = smul.u32 16, %s24
          %p387 = scmp.lt.s32.totalorder %s386, 31
          %s388 = scalar_select %p387, %s386, 31
          %s389 = smul.addr %s388, 8
          %s390 = scalar_lea.vmem %s0, %s389
          %s391 = smul.u32 16, %s24
        $region68: #{nn_pca_forward.1} parent=63 // pred_fallthru
          _
      $region64: #{nn_pca_forward.1} parent=5 // pred_fallthru
        _
      %p392 = scmp.le.s32.totalorder 1, %s24
      %p393 = scmp.lt.s32.totalorder %s24, 3
      %p394 = pnand %p392, %p393
      %p395 = pneg %p394
      // Predicated region
      $region69: #{nn_pca_forward.1} parent=5 // pred_check
        _
      $region70: #{nn_pca_forward.1} parent=5 // pred_check_branch
        %397 = sbr.rel (%p394) target = $region72
      $region71: #{nn_pca_forward.1} parent=5 // pred_region
        %s398 = ssub.s32 %s24, 1
        %s399 = smul.u32 16, %s29
        %p400 = scmp.lt.s32.totalorder %s399, 31
        %s401 = scalar_select %p400, %s399, 31
        %s402 = smul.addr %s401, 8
        %s403 = scalar_lea.vmem %s0, %s402
        %p404 = pneg %p50
        %p405 = pneg %p47
        %p406 = pneg %p71
        %p407 = pneg %p68
        %p408 = pneg %p92
        %p409 = pneg %p89
        %p410 = pneg %p113
        %p411 = pneg %p110
        %p412 = pneg %p134
        %p413 = pneg %p131
        %p414 = pneg %p155
        %p415 = pneg %p152
        %p416 = pneg %p176
        %p417 = pneg %p173
        %p418 = pneg %p197
        %p419 = pneg %p194
        %p420 = pneg %p218
        %p421 = pneg %p215
        %p422 = pneg %p239
        %p423 = pneg %p236
        %p424 = pneg %p260
        %p425 = pneg %p257
        %p426 = pneg %p281
        %p427 = pneg %p278
        %p428 = pneg %p302
        %p429 = pneg %p299
        %p430 = pneg %p328
        %p431 = pneg %p325
        %s432 = sand.u32 %s315, 1
        %s433 = scalar_lea.sflag [#allocation4], %s432
        %s434 = sand.u32 %s315, 1
        %s435 = scalar_lea.vmem [#allocation3], %s434
        %s436 = smul.u32 16, %s29
        %p437 = scmp.lt.s32.totalorder %s436, 31
        %s438 = scalar_select %p437, %s436, 31
        %s439 = smul.addr %s438, 8
        %s440 = scalar_lea.vmem %s0, %s439
        %s441 = smul.u32 16, %s29
        %v442 = vld [vmem:[%s440] sm:$0xff]
        %v443 = vld [vmem:[%s440 + $0x8] sm:$0xff]
        %v444 = vld [vmem:[%s440 + $0x10] sm:$0xff]
        %v445 = vld [vmem:[%s440 + $0x18] sm:$0xff]
        %v446 = vld [vmem:[%s440 + $0x20] sm:$0xff]
        %v447 = vld [vmem:[%s440 + $0x28] sm:$0xff]
        %v448 = vld [vmem:[%s440 + $0x30] sm:$0xff]
        %v449 = vld [vmem:[%s440 + $0x38] sm:$0xff]
        %v450 = vld [vmem:[%s440 + $0x40] sm:$0xff]
        %v451 = vld [vmem:[%s440 + $0x48] sm:$0xff]
        %v452 = vld [vmem:[%s440 + $0x50] sm:$0xff]
        %v453 = vld [vmem:[%s440 + $0x58] sm:$0xff]
        %v454 = vld [vmem:[%s440 + $0x60] sm:$0xff]
        %v455 = vld [vmem:[%s440 + $0x68] sm:$0xff]
        %v456 = vld [vmem:[%s440 + $0x70] sm:$0xff]
        %v457 = vld [vmem:[%s440 + $0x78] sm:$0xff]
        %v458 = vld [vmem:[%s1] sm:$0xff]
        %v459 = vld [vmem:[%s1 + $0x8] sm:$0xff]
        %v460 = vld [vmem:[%s1 + $0x10] sm:$0xff]
        %v461 = vld [vmem:[%s1 + $0x18] sm:$0xff]
        %v462 = vld [vmem:[%s1 + $0x20] sm:$0xff]
        %v463 = vld [vmem:[%s1 + $0x28] sm:$0xff]
        %v464 = vld [vmem:[%s1 + $0x30] sm:$0x3]
        %v465 = vld [vmem:[%s2] sm:$0xff]
        %v466 = vld [vmem:[%s2 + $0x8] sm:$0xff]
        %v467 = vld [vmem:[%s2 + $0x10] sm:$0xff]
        %v468 = vld [vmem:[%s2 + $0x18] sm:$0xff]
        %v469 = vld [vmem:[%s2 + $0x20] sm:$0xff]
        %v470 = vld [vmem:[%s2 + $0x28] sm:$0xff]
        %v471 = vld [vmem:[%s2 + $0x30] sm:$0x3]
        %473 = vset.pattern.permute.xlu0 0
        %474 = vperm.xlu0 %473, %v465
        %v475 = vpop.permute.xlu0 %474
        %478 = vset.pattern.permute.xlu0 0
        %479 = vperm.xlu0 %478, %v466
        %v480 = vpop.permute.xlu0 %479
        %483 = vset.pattern.permute.xlu0 0
        %484 = vperm.xlu0 %483, %v467
        %v485 = vpop.permute.xlu0 %484
        %488 = vset.pattern.permute.xlu0 0
        %489 = vperm.xlu0 %488, %v468
        %v490 = vpop.permute.xlu0 %489
        %493 = vset.pattern.permute.xlu0 0
        %494 = vperm.xlu0 %493, %v469
        %v495 = vpop.permute.xlu0 %494
        %498 = vset.pattern.permute.xlu0 0
        %499 = vperm.xlu0 %498, %v470
        %v500 = vpop.permute.xlu0 %499
        %503 = vset.pattern.permute.xlu0 0
        %504 = vperm.xlu0 %503, %v471
        %v505 = vpop.permute.xlu0 %504
        %vm507 = vcmask 818176
        %v509 = vsel %vm507, %v458, 0
        %v512 = vsel %vm507, %v459, 0
        %v515 = vsel %vm507, %v460, 0
        %v518 = vsel %vm507, %v461, 0
        %v521 = vsel %vm507, %v462, 0
        %v524 = vsel %vm507, %v463, 0
        %v527 = vsel %vm507, %v464, 0
        %v530 = vsel %vm507, %v442, 0
        %v533 = vsel %vm507, %v443, 0
        %v536 = vsel %vm507, %v444, 0
        %v539 = vsel %vm507, %v445, 0
        %v542 = vsel %vm507, %v446, 0
        %v545 = vsel %vm507, %v447, 0
        %v548 = vsel %vm507, %v448, 0
        %v551 = vsel %vm507, %v449, 0
        %v554 = vsel %vm507, %v450, 0
        %v557 = vsel %vm507, %v451, 0
        %v560 = vsel %vm507, %v452, 0
        %v563 = vsel %vm507, %v453, 0
        %v566 = vsel %vm507, %v454, 0
        %v569 = vsel %vm507, %v455, 0
        %v572 = vsel %vm507, %v456, 0
        %v575 = vsel %vm507, %v457, 0
        %577 = vmatpush.xpose.msra.mxu0 %v575
        %578 = vmatpush.xpose.msra.mxu0 %v572
        %579 = vmatpush.xpose.msra.mxu0 %v569
        %580 = vmatpush.xpose.msra.mxu0 %v566
        %581 = vmatpush.xpose.msra.mxu0 %v563
        %582 = vmatpush.xpose.msra.mxu0 %v560
        %583 = vmatpush.xpose.msra.mxu0 %v557
        %584 = vmatpush.xpose.msra.mxu0 %v554
        %585 = vmatpush.xpose.msra.mxu0 %v551
        %586 = vmatpush.xpose.msra.mxu0 %v548
        %587 = vmatpush.xpose.msra.mxu0 %v545
        %588 = vmatpush.xpose.msra.mxu0 %v542
        %589 = vmatpush.xpose.msra.mxu0 %v539
        %590 = vmatpush.xpose.msra.mxu0 %v536
        %591 = vmatpush.xpose.msra.mxu0 %v533
        %592 = vmatpush.xpose.msra.mxu0 %v530
        %593 = vmatmul.f32.gmra.mxu0 %v509
        %v594 = vpop.f32.mrf.mxu0
        %v595 = vadd.f32 %v475, %v594
        %596 = vmatmul.f32.gmra.mxu0 %v512
        %v597 = vpop.f32.mrf.mxu0
        %v598 = vadd.f32 %v480, %v597
        %599 = vmatmul.f32.gmra.mxu0 %v515
        %v600 = vpop.f32.mrf.mxu0
        %v601 = vadd.f32 %v485, %v600
        %602 = vmatmul.f32.gmra.mxu0 %v518
        %v603 = vpop.f32.mrf.mxu0
        %v604 = vadd.f32 %v490, %v603
        %605 = vmatmul.f32.gmra.mxu0 %v521
        %v606 = vpop.f32.mrf.mxu0
        %v607 = vadd.f32 %v495, %v606
        %608 = vmatmul.f32.gmra.mxu0 %v524
        %v609 = vpop.f32.mrf.mxu0
        %v610 = vadd.f32 %v500, %v609
        %611 = vmatmul.f32.gmra.mxu0 %v527
        %v612 = vpop.f32.mrf.mxu0
        %v613 = vadd.f32 %v505, %v612
        %614 = vdwg.mxu0
        %v615 = vmul.f32 %v595, 0.5
        %v616 = vmul.f32 %v598, 0.5
        %v617 = vmul.f32 %v601, 0.5
        %v618 = vmul.f32 %v604, 0.5
        %v619 = vmul.f32 %v607, 0.5
        %v620 = vmul.f32 %v610, 0.5
        %v621 = vmul.f32 %v613, 0.5
        %v622 = vmul.f32 %v595, 0.70710677
        %v623 = vmul.f32 %v598, 0.70710677
        %v624 = vmul.f32 %v601, 0.70710677
        %v625 = vmul.f32 %v604, 0.70710677
        %v626 = vmul.f32 %v607, 0.70710677
        %v627 = vmul.f32 %v610, 0.70710677
        %v628 = vmul.f32 %v613, 0.70710677
        %v629 = vmul.f32 %v622, %v622
        %v630 = vmin.f32 16.0, %v629
        %v631 = vmul.f32 %v630, 2.1237322e-06
        %v632 = vadd.f32 %v631, 0.00028619796
        %v633 = vmul.f32 %v630, %v632
        %v634 = vadd.f32 %v633, 0.0036580483
        %v635 = vmul.f32 %v630, %v634
        %v636 = vadd.f32 %v635, 0.05243302
        %v637 = vmul.f32 %v630, %v636
        %v638 = vadd.f32 %v637, 0.18741608
        %v639 = vmul.f32 %v630, %v638
        %v640 = vadd.f32 %v639, 1.1283791
        %v641 = vmul.f32 %v622, %v640
        %v642 = vmul.f32 %v630, 3.8918573e-05
        %v643 = vadd.f32 %v642, 0.001143296
        %v644 = vmul.f32 %v630, %v643
        %v645 = vadd.f32 %v644, 0.014752088
        %v646 = vmul.f32 %v630, %v645
        %v647 = vadd.f32 %v646, 0.112945676
        %v648 = vmul.f32 %v630, %v647
        %v649 = vadd.f32 %v648, 0.4994258
        %v650 = vmul.f32 %v630, %v649
        %v651 = vadd.f32 %v650, 1.0
        %v652 = vrcp.pop %v651
        %v653 = vmul.f32 %v651, %v652
        %v654 = vsub.f32 1.0, %v653
        %v655 = vmul.f32 %v652, %v654
        %v656 = vadd.f32 %v652, %v655
        %vm657 = vweird.f32 %v651
        %vm658 = vweird.f32 %v652
        %vm659 = vmor %vm657, %vm658
        %v660 = vsel %vm659, %v652, %v656
        %v661 = vand.u32 2147483647, %v651
        %vm662 = vcmp.eq.f32.partialorder %v661, 8.507059e+37
        %v663 = vand.u32 %v651, 2147483648
        %v664 = vor.u32 1.1754944e-38, %v663
        %v665 = vsel %vm662, %v664, %v660
        %v666 = vmul.f32 %v641, %v665
        %v667 = vmin.f32 %v666, 1.0
        %v668 = vmax.f32 %v667, -1.0
        %v669 = vmul.f32 %v623, %v623
        %v670 = vmin.f32 16.0, %v669
        %v671 = vmul.f32 %v670, 2.1237322e-06
        %v672 = vadd.f32 %v671, 0.00028619796
        %v673 = vmul.f32 %v670, %v672
        %v674 = vadd.f32 %v673, 0.0036580483
        %v675 = vmul.f32 %v670, %v674
        %v676 = vadd.f32 %v675, 0.05243302
        %v677 = vmul.f32 %v670, %v676
        %v678 = vadd.f32 %v677, 0.18741608
        %v679 = vmul.f32 %v670, %v678
        %v680 = vadd.f32 %v679, 1.1283791
        %v681 = vmul.f32 %v623, %v680
        %v682 = vmul.f32 %v670, 3.8918573e-05
        %v683 = vadd.f32 %v682, 0.001143296
        %v684 = vmul.f32 %v670, %v683
        %v685 = vadd.f32 %v684, 0.014752088
        %v686 = vmul.f32 %v670, %v685
        %v687 = vadd.f32 %v686, 0.112945676
        %v688 = vmul.f32 %v670, %v687
        %v689 = vadd.f32 %v688, 0.4994258
        %v690 = vmul.f32 %v670, %v689
        %v691 = vadd.f32 %v690, 1.0
        %v692 = vrcp.pop %v691
        %v693 = vmul.f32 %v691, %v692
        %v694 = vsub.f32 1.0, %v693
        %v695 = vmul.f32 %v692, %v694
        %v696 = vadd.f32 %v692, %v695
        %vm697 = vweird.f32 %v691
        %vm698 = vweird.f32 %v692
        %vm699 = vmor %vm697, %vm698
        %v700 = vsel %vm699, %v692, %v696
        %v701 = vand.u32 2147483647, %v691
        %vm702 = vcmp.eq.f32.partialorder %v701, 8.507059e+37
        %v703 = vand.u32 %v691, 2147483648
        %v704 = vor.u32 1.1754944e-38, %v703
        %v705 = vsel %vm702, %v704, %v700
        %v706 = vmul.f32 %v681, %v705
        %v707 = vmin.f32 %v706, 1.0
        %v708 = vmax.f32 %v707, -1.0
        %v709 = vmul.f32 %v624, %v624
        %v710 = vmin.f32 16.0, %v709
        %v711 = vmul.f32 %v710, 2.1237322e-06
        %v712 = vadd.f32 %v711, 0.00028619796
        %v713 = vmul.f32 %v710, %v712
        %v714 = vadd.f32 %v713, 0.0036580483
        %v715 = vmul.f32 %v710, %v714
        %v716 = vadd.f32 %v715, 0.05243302
        %v717 = vmul.f32 %v710, %v716
        %v718 = vadd.f32 %v717, 0.18741608
        %v719 = vmul.f32 %v710, %v718
        %v720 = vadd.f32 %v719, 1.1283791
        %v721 = vmul.f32 %v624, %v720
        %v722 = vmul.f32 %v710, 3.8918573e-05
        %v723 = vadd.f32 %v722, 0.001143296
        %v724 = vmul.f32 %v710, %v723
        %v725 = vadd.f32 %v724, 0.014752088
        %v726 = vmul.f32 %v710, %v725
        %v727 = vadd.f32 %v726, 0.112945676
        %v728 = vmul.f32 %v710, %v727
        %v729 = vadd.f32 %v728, 0.4994258
        %v730 = vmul.f32 %v710, %v729
        %v731 = vadd.f32 %v730, 1.0
        %v732 = vrcp.pop %v731
        %v733 = vmul.f32 %v731, %v732
        %v734 = vsub.f32 1.0, %v733
        %v735 = vmul.f32 %v732, %v734
        %v736 = vadd.f32 %v732, %v735
        %vm737 = vweird.f32 %v731
        %vm738 = vweird.f32 %v732
        %vm739 = vmor %vm737, %vm738
        %v740 = vsel %vm739, %v732, %v736
        %v741 = vand.u32 2147483647, %v731
        %vm742 = vcmp.eq.f32.partialorder %v741, 8.507059e+37
        %v743 = vand.u32 %v731, 2147483648
        %v744 = vor.u32 1.1754944e-38, %v743
        %v745 = vsel %vm742, %v744, %v740
        %v746 = vmul.f32 %v721, %v745
        %v747 = vmin.f32 %v746, 1.0
        %v748 = vmax.f32 %v747, -1.0
        %v749 = vmul.f32 %v625, %v625
        %v750 = vmin.f32 16.0, %v749
        %v751 = vmul.f32 %v750, 2.1237322e-06
        %v752 = vadd.f32 %v751, 0.00028619796
        %v753 = vmul.f32 %v750, %v752
        %v754 = vadd.f32 %v753, 0.0036580483
        %v755 = vmul.f32 %v750, %v754
        %v756 = vadd.f32 %v755, 0.05243302
        %v757 = vmul.f32 %v750, %v756
        %v758 = vadd.f32 %v757, 0.18741608
        %v759 = vmul.f32 %v750, %v758
        %v760 = vadd.f32 %v759, 1.1283791
        %v761 = vmul.f32 %v625, %v760
        %v762 = vmul.f32 %v750, 3.8918573e-05
        %v763 = vadd.f32 %v762, 0.001143296
        %v764 = vmul.f32 %v750, %v763
        %v765 = vadd.f32 %v764, 0.014752088
        %v766 = vmul.f32 %v750, %v765
        %v767 = vadd.f32 %v766, 0.112945676
        %v768 = vmul.f32 %v750, %v767
        %v769 = vadd.f32 %v768, 0.4994258
        %v770 = vmul.f32 %v750, %v769
        %v771 = vadd.f32 %v770, 1.0
        %v772 = vrcp.pop %v771
        %v773 = vmul.f32 %v771, %v772
        %v774 = vsub.f32 1.0, %v773
        %v775 = vmul.f32 %v772, %v774
        %v776 = vadd.f32 %v772, %v775
        %vm777 = vweird.f32 %v771
        %vm778 = vweird.f32 %v772
        %vm779 = vmor %vm777, %vm778
        %v780 = vsel %vm779, %v772, %v776
        %v781 = vand.u32 2147483647, %v771
        %vm782 = vcmp.eq.f32.partialorder %v781, 8.507059e+37
        %v783 = vand.u32 %v771, 2147483648
        %v784 = vor.u32 1.1754944e-38, %v783
        %v785 = vsel %vm782, %v784, %v780
        %v786 = vmul.f32 %v761, %v785
        %v787 = vmin.f32 %v786, 1.0
        %v788 = vmax.f32 %v787, -1.0
        %v789 = vmul.f32 %v626, %v626
        %v790 = vmin.f32 16.0, %v789
        %v791 = vmul.f32 %v790, 2.1237322e-06
        %v792 = vadd.f32 %v791, 0.00028619796
        %v793 = vmul.f32 %v790, %v792
        %v794 = vadd.f32 %v793, 0.0036580483
        %v795 = vmul.f32 %v790, %v794
        %v796 = vadd.f32 %v795, 0.05243302
        %v797 = vmul.f32 %v790, %v796
        %v798 = vadd.f32 %v797, 0.18741608
        %v799 = vmul.f32 %v790, %v798
        %v800 = vadd.f32 %v799, 1.1283791
        %v801 = vmul.f32 %v626, %v800
        %v802 = vmul.f32 %v790, 3.8918573e-05
        %v803 = vadd.f32 %v802, 0.001143296
        %v804 = vmul.f32 %v790, %v803
        %v805 = vadd.f32 %v804, 0.014752088
        %v806 = vmul.f32 %v790, %v805
        %v807 = vadd.f32 %v806, 0.112945676
        %v808 = vmul.f32 %v790, %v807
        %v809 = vadd.f32 %v808, 0.4994258
        %v810 = vmul.f32 %v790, %v809
        %v811 = vadd.f32 %v810, 1.0
        %v812 = vrcp.pop %v811
        %v813 = vmul.f32 %v811, %v812
        %v814 = vsub.f32 1.0, %v813
        %v815 = vmul.f32 %v812, %v814
        %v816 = vadd.f32 %v812, %v815
        %vm817 = vweird.f32 %v811
        %vm818 = vweird.f32 %v812
        %vm819 = vmor %vm817, %vm818
        %v820 = vsel %vm819, %v812, %v816
        %v821 = vand.u32 2147483647, %v811
        %vm822 = vcmp.eq.f32.partialorder %v821, 8.507059e+37
        %v823 = vand.u32 %v811, 2147483648
        %v824 = vor.u32 1.1754944e-38, %v823
        %v825 = vsel %vm822, %v824, %v820
        %v826 = vmul.f32 %v801, %v825
        %v827 = vmin.f32 %v826, 1.0
        %v828 = vmax.f32 %v827, -1.0
        %v829 = vmul.f32 %v627, %v627
        %v830 = vmin.f32 16.0, %v829
        %v831 = vmul.f32 %v830, 2.1237322e-06
        %v832 = vadd.f32 %v831, 0.00028619796
        %v833 = vmul.f32 %v830, %v832
        %v834 = vadd.f32 %v833, 0.0036580483
        %v835 = vmul.f32 %v830, %v834
        %v836 = vadd.f32 %v835, 0.05243302
        %v837 = vmul.f32 %v830, %v836
        %v838 = vadd.f32 %v837, 0.18741608
        %v839 = vmul.f32 %v830, %v838
        %v840 = vadd.f32 %v839, 1.1283791
        %v841 = vmul.f32 %v627, %v840
        %v842 = vmul.f32 %v830, 3.8918573e-05
        %v843 = vadd.f32 %v842, 0.001143296
        %v844 = vmul.f32 %v830, %v843
        %v845 = vadd.f32 %v844, 0.014752088
        %v846 = vmul.f32 %v830, %v845
        %v847 = vadd.f32 %v846, 0.112945676
        %v848 = vmul.f32 %v830, %v847
        %v849 = vadd.f32 %v848, 0.4994258
        %v850 = vmul.f32 %v830, %v849
        %v851 = vadd.f32 %v850, 1.0
        %v852 = vrcp.pop %v851
        %v853 = vmul.f32 %v851, %v852
        %v854 = vsub.f32 1.0, %v853
        %v855 = vmul.f32 %v852, %v854
        %v856 = vadd.f32 %v852, %v855
        %vm857 = vweird.f32 %v851
        %vm858 = vweird.f32 %v852
        %vm859 = vmor %vm857, %vm858
        %v860 = vsel %vm859, %v852, %v856
        %v861 = vand.u32 2147483647, %v851
        %vm862 = vcmp.eq.f32.partialorder %v861, 8.507059e+37
        %v863 = vand.u32 %v851, 2147483648
        %v864 = vor.u32 1.1754944e-38, %v863
        %v865 = vsel %vm862, %v864, %v860
        %v866 = vmul.f32 %v841, %v865
        %v867 = vmin.f32 %v866, 1.0
        %v868 = vmax.f32 %v867, -1.0
        %v869 = vmul.f32 %v628, %v628
        %v870 = vmin.f32 16.0, %v869
        %v871 = vmul.f32 %v870, 2.1237322e-06
        %v872 = vadd.f32 %v871, 0.00028619796
        %v873 = vmul.f32 %v870, %v872
        %v874 = vadd.f32 %v873, 0.0036580483
        %v875 = vmul.f32 %v870, %v874
        %v876 = vadd.f32 %v875, 0.05243302
        %v877 = vmul.f32 %v870, %v876
        %v878 = vadd.f32 %v877, 0.18741608
        %v879 = vmul.f32 %v870, %v878
        %v880 = vadd.f32 %v879, 1.1283791
        %v881 = vmul.f32 %v628, %v880
        %v882 = vmul.f32 %v870, 3.8918573e-05
        %v883 = vadd.f32 %v882, 0.001143296
        %v884 = vmul.f32 %v870, %v883
        %v885 = vadd.f32 %v884, 0.014752088
        %v886 = vmul.f32 %v870, %v885
        %v887 = vadd.f32 %v886, 0.112945676
        %v888 = vmul.f32 %v870, %v887
        %v889 = vadd.f32 %v888, 0.4994258
        %v890 = vmul.f32 %v870, %v889
        %v891 = vadd.f32 %v890, 1.0
        %v892 = vrcp.pop %v891
        %v893 = vmul.f32 %v891, %v892
        %v894 = vsub.f32 1.0, %v893
        %v895 = vmul.f32 %v892, %v894
        %v896 = vadd.f32 %v892, %v895
        %vm897 = vweird.f32 %v891
        %vm898 = vweird.f32 %v892
        %vm899 = vmor %vm897, %vm898
        %v900 = vsel %vm899, %v892, %v896
        %v901 = vand.u32 2147483647, %v891
        %vm902 = vcmp.eq.f32.partialorder %v901, 8.507059e+37
        %v903 = vand.u32 %v891, 2147483648
        %v904 = vor.u32 1.1754944e-38, %v903
        %v905 = vsel %vm902, %v904, %v900
        %v906 = vmul.f32 %v881, %v905
        %v907 = vmin.f32 %v906, 1.0
        %v908 = vmax.f32 %v907, -1.0
        %v909 = vadd.f32 %v668, 1.0
        %v910 = vadd.f32 %v708, 1.0
        %v911 = vadd.f32 %v748, 1.0
        %v912 = vadd.f32 %v788, 1.0
        %v913 = vadd.f32 %v828, 1.0
        %v914 = vadd.f32 %v868, 1.0
        %v915 = vadd.f32 %v908, 1.0
        %v916 = vmul.f32 %v615, %v909
        %v917 = vmul.f32 %v616, %v910
        %v918 = vmul.f32 %v617, %v911
        %v919 = vmul.f32 %v618, %v912
        %v920 = vmul.f32 %v619, %v913
        %v921 = vmul.f32 %v620, %v914
        %v922 = vmul.f32 %v621, %v915
        %v923 = vld [vmem:[%s3] sm:$0xff]
        %v924 = vld [vmem:[%s3 + $0x8] sm:$0xff]
        %v925 = vld [vmem:[%s3 + $0x10] sm:$0xf]
        %v926 = vld [vmem:[%s4] sm:$0xff]
        %v927 = vld [vmem:[%s4 + $0x8] sm:$0xff]
        %v928 = vld [vmem:[%s4 + $0x10] sm:$0xf]
        %930 = vset.pattern.permute.xlu0 0
        %931 = vperm.xlu0 %930, %v926
        %v932 = vpop.permute.xlu0 %931
        %935 = vset.pattern.permute.xlu0 0
        %936 = vperm.xlu0 %935, %v927
        %v937 = vpop.permute.xlu0 %936
        %940 = vset.pattern.permute.xlu0 0
        %941 = vperm.xlu0 %940, %v928
        %v942 = vpop.permute.xlu0 %941
        %vm944 = vcmask 408576
        %v946 = vsel %vm944, %v923, 0
        %v949 = vsel %vm944, %v924, 0
        %v952 = vsel %vm944, %v925, 0
        %vm954 = vcmask 1041408
        %v956 = vsel %vm954, %v922, 0
        %958 = vmatpush.msra.mxu0 0.0
        %959 = vmatpush.msra.mxu0 0.0
        %960 = vmatpush.msra.mxu0 0.0
        %961 = vmatpush.msra.mxu0 0.0
        %962 = vmatpush.msra.mxu0 0.0
        %963 = vmatpush.msra.mxu0 0.0
        %964 = vmatpush.msra.mxu0 0.0
        %965 = vmatpush.msra.mxu0 0.0
        %966 = vmatpush.msra.mxu0 0.0
        %967 = vmatpush.msra.mxu0 %v956
        %968 = vmatpush.msra.mxu0 %v921
        %969 = vmatpush.msra.mxu0 %v920
        %970 = vmatpush.msra.mxu0 %v919
        %971 = vmatpush.msra.mxu0 %v918
        %972 = vmatpush.msra.mxu0 %v917
        %973 = vmatpush.msra.mxu0 %v916
        %974 = vmatmul.f32.gmra.mxu0 %v946
        %v975 = vpop.f32.mrf.mxu0
        %v976 = vadd.f32 %v932, %v975
        %977 = vmatmul.f32.gmra.mxu0 %v949
        %v978 = vpop.f32.mrf.mxu0
        %v979 = vadd.f32 %v937, %v978
        %980 = vmatmul.f32.gmra.mxu0 %v952
        %v981 = vpop.f32.mrf.mxu0
        %v982 = vadd.f32 %v942, %v981
        %983 = vdwg.mxu0
        %v984 = vmul.f32 %v976, 0.5
        %v985 = vmul.f32 %v979, 0.5
        %v986 = vmul.f32 %v982, 0.5
        %v987 = vmul.f32 %v976, 0.70710677
        %v988 = vmul.f32 %v979, 0.70710677
        %v989 = vmul.f32 %v982, 0.70710677
        %v990 = vmul.f32 %v987, %v987
        %v991 = vmin.f32 16.0, %v990
        %v992 = vmul.f32 %v991, 2.1237322e-06
        %v993 = vadd.f32 %v992, 0.00028619796
        %v994 = vmul.f32 %v991, %v993
        %v995 = vadd.f32 %v994, 0.0036580483
        %v996 = vmul.f32 %v991, %v995
        %v997 = vadd.f32 %v996, 0.05243302
        %v998 = vmul.f32 %v991, %v997
        %v999 = vadd.f32 %v998, 0.18741608
        %v1000 = vmul.f32 %v991, %v999
        %v1001 = vadd.f32 %v1000, 1.1283791
        %v1002 = vmul.f32 %v987, %v1001
        %v1003 = vmul.f32 %v991, 3.8918573e-05
        %v1004 = vadd.f32 %v1003, 0.001143296
        %v1005 = vmul.f32 %v991, %v1004
        %v1006 = vadd.f32 %v1005, 0.014752088
        %v1007 = vmul.f32 %v991, %v1006
        %v1008 = vadd.f32 %v1007, 0.112945676
        %v1009 = vmul.f32 %v991, %v1008
        %v1010 = vadd.f32 %v1009, 0.4994258
        %v1011 = vmul.f32 %v991, %v1010
        %v1012 = vadd.f32 %v1011, 1.0
        %v1013 = vrcp.pop %v1012
        %v1014 = vmul.f32 %v1012, %v1013
        %v1015 = vsub.f32 1.0, %v1014
        %v1016 = vmul.f32 %v1013, %v1015
        %v1017 = vadd.f32 %v1013, %v1016
        %vm1018 = vweird.f32 %v1012
        %vm1019 = vweird.f32 %v1013
        %vm1020 = vmor %vm1018, %vm1019
        %v1021 = vsel %vm1020, %v1013, %v1017
        %v1022 = vand.u32 2147483647, %v1012
        %vm1023 = vcmp.eq.f32.partialorder %v1022, 8.507059e+37
        %v1024 = vand.u32 %v1012, 2147483648
        %v1025 = vor.u32 1.1754944e-38, %v1024
        %v1026 = vsel %vm1023, %v1025, %v1021
        %v1027 = vmul.f32 %v1002, %v1026
        %v1028 = vmin.f32 %v1027, 1.0
        %v1029 = vmax.f32 %v1028, -1.0
        %v1030 = vmul.f32 %v988, %v988
        %v1031 = vmin.f32 16.0, %v1030
        %v1032 = vmul.f32 %v1031, 2.1237322e-06
        %v1033 = vadd.f32 %v1032, 0.00028619796
        %v1034 = vmul.f32 %v1031, %v1033
        %v1035 = vadd.f32 %v1034, 0.0036580483
        %v1036 = vmul.f32 %v1031, %v1035
        %v1037 = vadd.f32 %v1036, 0.05243302
        %v1038 = vmul.f32 %v1031, %v1037
        %v1039 = vadd.f32 %v1038, 0.18741608
        %v1040 = vmul.f32 %v1031, %v1039
        %v1041 = vadd.f32 %v1040, 1.1283791
        %v1042 = vmul.f32 %v988, %v1041
        %v1043 = vmul.f32 %v1031, 3.8918573e-05
        %v1044 = vadd.f32 %v1043, 0.001143296
        %v1045 = vmul.f32 %v1031, %v1044
        %v1046 = vadd.f32 %v1045, 0.014752088
        %v1047 = vmul.f32 %v1031, %v1046
        %v1048 = vadd.f32 %v1047, 0.112945676
        %v1049 = vmul.f32 %v1031, %v1048
        %v1050 = vadd.f32 %v1049, 0.4994258
        %v1051 = vmul.f32 %v1031, %v1050
        %v1052 = vadd.f32 %v1051, 1.0
        %v1053 = vrcp.pop %v1052
        %v1054 = vmul.f32 %v1052, %v1053
        %v1055 = vsub.f32 1.0, %v1054
        %v1056 = vmul.f32 %v1053, %v1055
        %v1057 = vadd.f32 %v1053, %v1056
        %vm1058 = vweird.f32 %v1052
        %vm1059 = vweird.f32 %v1053
        %vm1060 = vmor %vm1058, %vm1059
        %v1061 = vsel %vm1060, %v1053, %v1057
        %v1062 = vand.u32 2147483647, %v1052
        %vm1063 = vcmp.eq.f32.partialorder %v1062, 8.507059e+37
        %v1064 = vand.u32 %v1052, 2147483648
        %v1065 = vor.u32 1.1754944e-38, %v1064
        %v1066 = vsel %vm1063, %v1065, %v1061
        %v1067 = vmul.f32 %v1042, %v1066
        %v1068 = vmin.f32 %v1067, 1.0
        %v1069 = vmax.f32 %v1068, -1.0
        %v1070 = vmul.f32 %v989, %v989
        %v1071 = vmin.f32 16.0, %v1070
        %v1072 = vmul.f32 %v1071, 2.1237322e-06
        %v1073 = vadd.f32 %v1072, 0.00028619796
        %v1074 = vmul.f32 %v1071, %v1073
        %v1075 = vadd.f32 %v1074, 0.0036580483
        %v1076 = vmul.f32 %v1071, %v1075
        %v1077 = vadd.f32 %v1076, 0.05243302
        %v1078 = vmul.f32 %v1071, %v1077
        %v1079 = vadd.f32 %v1078, 0.18741608
        %v1080 = vmul.f32 %v1071, %v1079
        %v1081 = vadd.f32 %v1080, 1.1283791
        %v1082 = vmul.f32 %v989, %v1081
        %v1083 = vmul.f32 %v1071, 3.8918573e-05
        %v1084 = vadd.f32 %v1083, 0.001143296
        %v1085 = vmul.f32 %v1071, %v1084
        %v1086 = vadd.f32 %v1085, 0.014752088
        %v1087 = vmul.f32 %v1071, %v1086
        %v1088 = vadd.f32 %v1087, 0.112945676
        %v1089 = vmul.f32 %v1071, %v1088
        %v1090 = vadd.f32 %v1089, 0.4994258
        %v1091 = vmul.f32 %v1071, %v1090
        %v1092 = vadd.f32 %v1091, 1.0
        %v1093 = vrcp.pop %v1092
        %v1094 = vmul.f32 %v1092, %v1093
        %v1095 = vsub.f32 1.0, %v1094
        %v1096 = vmul.f32 %v1093, %v1095
        %v1097 = vadd.f32 %v1093, %v1096
        %vm1098 = vweird.f32 %v1092
        %vm1099 = vweird.f32 %v1093
        %vm1100 = vmor %vm1098, %vm1099
        %v1101 = vsel %vm1100, %v1093, %v1097
        %v1102 = vand.u32 2147483647, %v1092
        %vm1103 = vcmp.eq.f32.partialorder %v1102, 8.507059e+37
        %v1104 = vand.u32 %v1092, 2147483648
        %v1105 = vor.u32 1.1754944e-38, %v1104
        %v1106 = vsel %vm1103, %v1105, %v1101
        %v1107 = vmul.f32 %v1082, %v1106
        %v1108 = vmin.f32 %v1107, 1.0
        %v1109 = vmax.f32 %v1108, -1.0
        %v1110 = vadd.f32 %v1029, 1.0
        %v1111 = vadd.f32 %v1069, 1.0
        %v1112 = vadd.f32 %v1109, 1.0
        %v1113 = vmul.f32 %v984, %v1110
        %v1114 = vmul.f32 %v985, %v1111
        %v1115 = vmul.f32 %v986, %v1112
        %v1116 = vld [vmem:[%s5] sm:$0xff]
        %v1117 = vld [vmem:[%s5 + $0x8] sm:$0x3]
        %v1118 = vld [vmem:[%s6] sm:$0xff]
        %v1119 = vld [vmem:[%s6 + $0x8] sm:$0x3]
        %1121 = vset.pattern.permute.xlu0 0
        %1122 = vperm.xlu0 %1121, %v1118
        %v1123 = vpop.permute.xlu0 %1122
        %1126 = vset.pattern.permute.xlu0 0
        %1127 = vperm.xlu0 %1126, %v1119
        %v1128 = vpop.permute.xlu0 %1127
        %vm1130 = vcmask 162816
        %v1132 = vsel %vm1130, %v1116, 0
        %v1135 = vsel %vm1130, %v1117, 0
        %vm1137 = vcmask 1043456
        %v1139 = vsel %vm1137, %v1115, 0
        %1141 = vmatpush.msra.mxu0 0.0
        %1142 = vmatpush.msra.mxu0 0.0
        %1143 = vmatpush.msra.mxu0 0.0
        %1144 = vmatpush.msra.mxu0 0.0
        %1145 = vmatpush.msra.mxu0 0.0
        %1146 = vmatpush.msra.mxu0 0.0
        %1147 = vmatpush.msra.mxu0 0.0
        %1148 = vmatpush.msra.mxu0 0.0
        %1149 = vmatpush.msra.mxu0 0.0
        %1150 = vmatpush.msra.mxu0 0.0
        %1151 = vmatpush.msra.mxu0 0.0
        %1152 = vmatpush.msra.mxu0 0.0
        %1153 = vmatpush.msra.mxu0 0.0
        %1154 = vmatpush.msra.mxu0 %v1139
        %1155 = vmatpush.msra.mxu0 %v1114
        %1156 = vmatpush.msra.mxu0 %v1113
        %1157 = vmatmul.f32.gmra.mxu0 %v1132
        %v1158 = vpop.f32.mrf.mxu0
        %v1159 = vadd.f32 %v1123, %v1158
        %1160 = vmatmul.f32.gmra.mxu0 %v1135
        %v1161 = vpop.f32.mrf.mxu0
        %v1162 = vadd.f32 %v1128, %v1161
        %1163 = vdwg.mxu0
        %v1164 = vmul.f32 %v1159, 0.5
        %v1165 = vmul.f32 %v1162, 0.5
        %v1166 = vmul.f32 %v1159, 0.70710677
        %v1167 = vmul.f32 %v1162, 0.70710677
        %v1168 = vmul.f32 %v1166, %v1166
        %v1169 = vmin.f32 16.0, %v1168
        %v1170 = vmul.f32 %v1169, 2.1237322e-06
        %v1171 = vadd.f32 %v1170, 0.00028619796
        %v1172 = vmul.f32 %v1169, %v1171
        %v1173 = vadd.f32 %v1172, 0.0036580483
        %v1174 = vmul.f32 %v1169, %v1173
        %v1175 = vadd.f32 %v1174, 0.05243302
        %v1176 = vmul.f32 %v1169, %v1175
        %v1177 = vadd.f32 %v1176, 0.18741608
        %v1178 = vmul.f32 %v1169, %v1177
        %v1179 = vadd.f32 %v1178, 1.1283791
        %v1180 = vmul.f32 %v1166, %v1179
        %v1181 = vmul.f32 %v1169, 3.8918573e-05
        %v1182 = vadd.f32 %v1181, 0.001143296
        %v1183 = vmul.f32 %v1169, %v1182
        %v1184 = vadd.f32 %v1183, 0.014752088
        %v1185 = vmul.f32 %v1169, %v1184
        %v1186 = vadd.f32 %v1185, 0.112945676
        %v1187 = vmul.f32 %v1169, %v1186
        %v1188 = vadd.f32 %v1187, 0.4994258
        %v1189 = vmul.f32 %v1169, %v1188
        %v1190 = vadd.f32 %v1189, 1.0
        %v1191 = vrcp.pop %v1190
        %v1192 = vmul.f32 %v1190, %v1191
        %v1193 = vsub.f32 1.0, %v1192
        %v1194 = vmul.f32 %v1191, %v1193
        %v1195 = vadd.f32 %v1191, %v1194
        %vm1196 = vweird.f32 %v1190
        %vm1197 = vweird.f32 %v1191
        %vm1198 = vmor %vm1196, %vm1197
        %v1199 = vsel %vm1198, %v1191, %v1195
        %v1200 = vand.u32 2147483647, %v1190
        %vm1201 = vcmp.eq.f32.partialorder %v1200, 8.507059e+37
        %v1202 = vand.u32 %v1190, 2147483648
        %v1203 = vor.u32 1.1754944e-38, %v1202
        %v1204 = vsel %vm1201, %v1203, %v1199
        %v1205 = vmul.f32 %v1180, %v1204
        %v1206 = vmin.f32 %v1205, 1.0
        %v1207 = vmax.f32 %v1206, -1.0
        %v1208 = vmul.f32 %v1167, %v1167
        %v1209 = vmin.f32 16.0, %v1208
        %v1210 = vmul.f32 %v1209, 2.1237322e-06
        %v1211 = vadd.f32 %v1210, 0.00028619796
        %v1212 = vmul.f32 %v1209, %v1211
        %v1213 = vadd.f32 %v1212, 0.0036580483
        %v1214 = vmul.f32 %v1209, %v1213
        %v1215 = vadd.f32 %v1214, 0.05243302
        %v1216 = vmul.f32 %v1209, %v1215
        %v1217 = vadd.f32 %v1216, 0.18741608
        %v1218 = vmul.f32 %v1209, %v1217
        %v1219 = vadd.f32 %v1218, 1.1283791
        %v1220 = vmul.f32 %v1167, %v1219
        %v1221 = vmul.f32 %v1209, 3.8918573e-05
        %v1222 = vadd.f32 %v1221, 0.001143296
        %v1223 = vmul.f32 %v1209, %v1222
        %v1224 = vadd.f32 %v1223, 0.014752088
        %v1225 = vmul.f32 %v1209, %v1224
        %v1226 = vadd.f32 %v1225, 0.112945676
        %v1227 = vmul.f32 %v1209, %v1226
        %v1228 = vadd.f32 %v1227, 0.4994258
        %v1229 = vmul.f32 %v1209, %v1228
        %v1230 = vadd.f32 %v1229, 1.0
        %v1231 = vrcp.pop %v1230
        %v1232 = vmul.f32 %v1230, %v1231
        %v1233 = vsub.f32 1.0, %v1232
        %v1234 = vmul.f32 %v1231, %v1233
        %v1235 = vadd.f32 %v1231, %v1234
        %vm1236 = vweird.f32 %v1230
        %vm1237 = vweird.f32 %v1231
        %vm1238 = vmor %vm1236, %vm1237
        %v1239 = vsel %vm1238, %v1231, %v1235
        %v1240 = vand.u32 2147483647, %v1230
        %vm1241 = vcmp.eq.f32.partialorder %v1240, 8.507059e+37
        %v1242 = vand.u32 %v1230, 2147483648
        %v1243 = vor.u32 1.1754944e-38, %v1242
        %v1244 = vsel %vm1241, %v1243, %v1239
        %v1245 = vmul.f32 %v1220, %v1244
        %v1246 = vmin.f32 %v1245, 1.0
        %v1247 = vmax.f32 %v1246, -1.0
        %v1248 = vadd.f32 %v1207, 1.0
        %v1249 = vadd.f32 %v1247, 1.0
        %v1250 = vmul.f32 %v1164, %v1248
        %v1251 = vmul.f32 %v1165, %v1249
        %v1252 = vld [vmem:[%s7] sm:$0x1f]
        %v1253 = vld [vmem:[%s8] sm:$0x1f]
        %1255 = vset.pattern.permute.xlu0 0
        %1256 = vperm.xlu0 %1255, %v1253
        %v1257 = vpop.permute.xlu0 %1256
        %vm1259 = vcmask 80896
        %v1261 = vsel %vm1259, %v1252, 0
        %v1264 = vsel %vm954, %v1251, 0
        %1266 = vmatpush.msra.mxu0 0.0
        %1267 = vmatpush.msra.mxu0 0.0
        %1268 = vmatpush.msra.mxu0 0.0
        %1269 = vmatpush.msra.mxu0 0.0
        %1270 = vmatpush.msra.mxu0 0.0
        %1271 = vmatpush.msra.mxu0 0.0
        %1272 = vmatpush.msra.mxu0 0.0
        %1273 = vmatpush.msra.mxu0 0.0
        %1274 = vmatpush.msra.mxu0 0.0
        %1275 = vmatpush.msra.mxu0 0.0
        %1276 = vmatpush.msra.mxu0 0.0
        %1277 = vmatpush.msra.mxu0 0.0
        %1278 = vmatpush.msra.mxu0 0.0
        %1279 = vmatpush.msra.mxu0 0.0
        %1280 = vmatpush.msra.mxu0 %v1264
        %1281 = vmatpush.msra.mxu0 %v1250
        %1282 = vmatmul.f32.gmra.mxu0 %v1261
        %v1283 = vpop.f32.mrf.mxu0
        %v1284 = vadd.f32 %v1257, %v1283
        %1285 = vdwg.mxu0
        %v1286 = vmul.f32 %v1284, 0.5
        %v1287 = vmul.f32 %v1284, 0.70710677
        %v1288 = vmul.f32 %v1287, %v1287
        %v1289 = vmin.f32 16.0, %v1288
        %v1290 = vmul.f32 %v1289, 2.1237322e-06
        %v1291 = vadd.f32 %v1290, 0.00028619796
        %v1292 = vmul.f32 %v1289, %v1291
        %v1293 = vadd.f32 %v1292, 0.0036580483
        %v1294 = vmul.f32 %v1289, %v1293
        %v1295 = vadd.f32 %v1294, 0.05243302
        %v1296 = vmul.f32 %v1289, %v1295
        %v1297 = vadd.f32 %v1296, 0.18741608
        %v1298 = vmul.f32 %v1289, %v1297
        %v1299 = vadd.f32 %v1298, 1.1283791
        %v1300 = vmul.f32 %v1287, %v1299
        %v1301 = vmul.f32 %v1289, 3.8918573e-05
        %v1302 = vadd.f32 %v1301, 0.001143296
        %v1303 = vmul.f32 %v1289, %v1302
        %v1304 = vadd.f32 %v1303, 0.014752088
        %v1305 = vmul.f32 %v1289, %v1304
        %v1306 = vadd.f32 %v1305, 0.112945676
        %v1307 = vmul.f32 %v1289, %v1306
        %v1308 = vadd.f32 %v1307, 0.4994258
        %v1309 = vmul.f32 %v1289, %v1308
        %v1310 = vadd.f32 %v1309, 1.0
        %v1311 = vrcp.pop %v1310
        %v1312 = vmul.f32 %v1310, %v1311
        %v1313 = vsub.f32 1.0, %v1312
        %v1314 = vmul.f32 %v1311, %v1313
        %v1315 = vadd.f32 %v1311, %v1314
        %vm1316 = vweird.f32 %v1310
        %vm1317 = vweird.f32 %v1311
        %vm1318 = vmor %vm1316, %vm1317
        %v1319 = vsel %vm1318, %v1311, %v1315
        %v1320 = vand.u32 2147483647, %v1310
        %vm1321 = vcmp.eq.f32.partialorder %v1320, 8.507059e+37
        %v1322 = vand.u32 %v1310, 2147483648
        %v1323 = vor.u32 1.1754944e-38, %v1322
        %v1324 = vsel %vm1321, %v1323, %v1319
        %v1325 = vmul.f32 %v1300, %v1324
        %v1326 = vmin.f32 %v1325, 1.0
        %v1327 = vmax.f32 %v1326, -1.0
        %v1328 = vadd.f32 %v1327, 1.0
        %v1329 = vmul.f32 %v1286, %v1328
        %v1330 = vld [vmem:[%s9] sm:$0x3]
        %v1331 = vld [vmem:[%s10] sm:$0x3]
        %1333 = vset.pattern.permute.xlu0 0
        %1334 = vperm.xlu0 %1333, %v1331
        %v1335 = vpop.permute.xlu0 %1334
        %vm1337 = vcmask 39936
        %v1339 = vsel %vm1337, %v1330, 0
        %vm1341 = vcmask 1044480
        %v1343 = vsel %vm1341, %v1329, 0
        %1345 = vmatpush.msra.mxu0 0.0
        %1346 = vmatpush.msra.mxu0 0.0
        %1347 = vmatpush.msra.mxu0 0.0
        %1348 = vmatpush.msra.mxu0 0.0
        %1349 = vmatpush.msra.mxu0 0.0
        %1350 = vmatpush.msra.mxu0 0.0
        %1351 = vmatpush.msra.mxu0 0.0
        %1352 = vmatpush.msra.mxu0 0.0
        %1353 = vmatpush.msra.mxu0 0.0
        %1354 = vmatpush.msra.mxu0 0.0
        %1355 = vmatpush.msra.mxu0 0.0
        %1356 = vmatpush.msra.mxu0 0.0
        %1357 = vmatpush.msra.mxu0 0.0
        %1358 = vmatpush.msra.mxu0 0.0
        %1359 = vmatpush.msra.mxu0 0.0
        %1360 = vmatpush.msra.mxu0 %v1343
        %1361 = vmatmul.f32.gmra.mxu0 %v1339
        %v1362 = vpop.f32.mrf.mxu0
        %v1363 = vadd.f32 %v1335, %v1362
        %1364 = vdwg.mxu0
        %v1365 = vmul.f32 %v1363, 0.5
        %v1366 = vmul.f32 %v1363, 0.70710677
        %v1367 = vmul.f32 %v1366, %v1366
        %v1368 = vmin.f32 16.0, %v1367
        %v1369 = vmul.f32 %v1368, 2.1237322e-06
        %v1370 = vadd.f32 %v1369, 0.00028619796
        %v1371 = vmul.f32 %v1368, %v1370
        %v1372 = vadd.f32 %v1371, 0.0036580483
        %v1373 = vmul.f32 %v1368, %v1372
        %v1374 = vadd.f32 %v1373, 0.05243302
        %v1375 = vmul.f32 %v1368, %v1374
        %v1376 = vadd.f32 %v1375, 0.18741608
        %v1377 = vmul.f32 %v1368, %v1376
        %v1378 = vadd.f32 %v1377, 1.1283791
        %v1379 = vmul.f32 %v1366, %v1378
        %v1380 = vmul.f32 %v1368, 3.8918573e-05
        %v1381 = vadd.f32 %v1380, 0.001143296
        %v1382 = vmul.f32 %v1368, %v1381
        %v1383 = vadd.f32 %v1382, 0.014752088
        %v1384 = vmul.f32 %v1368, %v1383
        %v1385 = vadd.f32 %v1384, 0.112945676
        %v1386 = vmul.f32 %v1368, %v1385
        %v1387 = vadd.f32 %v1386, 0.4994258
        %v1388 = vmul.f32 %v1368, %v1387
        %v1389 = vadd.f32 %v1388, 1.0
        %v1390 = vrcp.pop %v1389
        %v1391 = vmul.f32 %v1389, %v1390
        %v1392 = vsub.f32 1.0, %v1391
        %v1393 = vmul.f32 %v1390, %v1392
        %v1394 = vadd.f32 %v1390, %v1393
        %vm1395 = vweird.f32 %v1389
        %vm1396 = vweird.f32 %v1390
        %vm1397 = vmor %vm1395, %vm1396
        %v1398 = vsel %vm1397, %v1390, %v1394
        %v1399 = vand.u32 2147483647, %v1389
        %vm1400 = vcmp.eq.f32.partialorder %v1399, 8.507059e+37
        %v1401 = vand.u32 %v1389, 2147483648
        %v1402 = vor.u32 1.1754944e-38, %v1401
        %v1403 = vsel %vm1400, %v1402, %v1398
        %v1404 = vmul.f32 %v1379, %v1403
        %v1405 = vmin.f32 %v1404, 1.0
        %v1406 = vmax.f32 %v1405, -1.0
        %v1407 = vadd.f32 %v1406, 1.0
        %v1408 = vmul.f32 %v1365, %v1407
        %v1409 = vld [vmem:[%s11] sm:$0x1]
        %v1410 = vld [vmem:[#allocation2] sm:$0x1]
        %1412 = vset.pattern.permute.xlu0 0
        %1413 = vperm.xlu0 %1412, %v1410
        %v1414 = vpop.permute.xlu0 %1413
        %v1416 = vperm.slane %v1414, 0
        %vm1417 = vcmask 15360
        %v1419 = vsel %vm1417, %v1409, 0
        %v1422 = vsel %vm954, %v1408, 0
        %1424 = vmatpush.msra.mxu0 0.0
        %1425 = vmatpush.msra.mxu0 0.0
        %1426 = vmatpush.msra.mxu0 0.0
        %1427 = vmatpush.msra.mxu0 0.0
        %1428 = vmatpush.msra.mxu0 0.0
        %1429 = vmatpush.msra.mxu0 0.0
        %1430 = vmatpush.msra.mxu0 0.0
        %1431 = vmatpush.msra.mxu0 0.0
        %1432 = vmatpush.msra.mxu0 0.0
        %1433 = vmatpush.msra.mxu0 0.0
        %1434 = vmatpush.msra.mxu0 0.0
        %1435 = vmatpush.msra.mxu0 0.0
        %1436 = vmatpush.msra.mxu0 0.0
        %1437 = vmatpush.msra.mxu0 0.0
        %1438 = vmatpush.msra.mxu0 0.0
        %1439 = vmatpush.msra.mxu0 %v1422
        %1440 = vmatmul.f32.gmra.mxu0 %v1419
        %v1441 = vpop.f32.mrf.mxu0
        %v1442 = vadd.f32 %v1416, %v1441
        %1443 = vdwg.mxu0
        %v1444 = vxor.u32 %v1442, 2147483648
        %v1445 = vmul.f32 %v1444, 1.442695
        %v1446 = vpow.pop %v1445
        %v1447 = vadd.f32 %v1446, 1.0
        %v1448 = vrcp.pop %v1447
        %v1449 = vmul.f32 %v1447, %v1448
        %v1450 = vsub.f32 1.0, %v1449
        %v1451 = vmul.f32 %v1448, %v1450
        %v1452 = vadd.f32 %v1448, %v1451
        %vm1453 = vweird.f32 %v1447
        %vm1454 = vweird.f32 %v1448
        %vm1455 = vmor %vm1453, %vm1454
        %v1456 = vsel %vm1455, %v1448, %v1452
        %v1457 = vand.u32 2147483647, %v1447
        %vm1458 = vcmp.eq.f32.partialorder %v1457, 8.507059e+37
        %v1459 = vand.u32 %v1447, 2147483648
        %v1460 = vor.u32 1.1754944e-38, %v1459
        %v1461 = vsel %vm1458, %v1460, %v1456
        %v1462 = vmul.f32 1.0, %v1461
        %1463 = vst [vmem:[%s435] sm:$0x1] %v1462
        %s1464 = sand.u32 %s315, 1
        %s1465 = scalar_lea.sflag [#allocation4], %s1464
        %s1466 = sand.u32 %s315, 1
        %s1467 = scalar_lea.vmem [#allocation3], %s1466
        // Predicated region
        $region73: #{nn_pca_forward.1} parent=71 // pred_check
          %p1468 = pneg %p325
        $region74: #{nn_pca_forward.1} parent=71 // pred_check_branch
          %1470 = sbr.rel (%p1468) target = $region76
        $region75: #{nn_pca_forward.1} parent=71 // pred_region
          %1472 = vsyncadd %s1465, 0
          %s1473 = scalar_lea.hbm %s13, %s29
          %s1475 = sshll.u32 %s1467, 4
          %s1476 = int_to_ptr.vmem [resolvable:$true] %s1475
          %s1477 = sshll.u32 %s1473, 4
          %s1478 = int_to_ptr.hbm [resolvable:$true] %s1477
          %1480 = dma.vmem_to_hbm [thread:$0]  %s1476, 16, %s1478, %s1465
        $region76: #{nn_pca_forward.1} parent=71 // pred_fallthru
          _
      $region72: #{nn_pca_forward.1} parent=5 // pred_fallthru
        _
      %p1481 = scmp.le.s32.totalorder 2, %s24
      // Predicated region
      $region77: #{nn_pca_forward.1} parent=5 // pred_check
        %p1482 = pneg %p1481
      $region78: #{nn_pca_forward.1} parent=5 // pred_check_branch
        %1484 = sbr.rel (%p1482) target = $region80
      $region79: #{nn_pca_forward.1} parent=5 // pred_region
        %s1485 = ssub.s32 %s24, 2
        // Predicated region
        $region81: #{nn_pca_forward.1} parent=79 // pred_check
          %p1486 = pneg %p331
        $region82: #{nn_pca_forward.1} parent=79 // pred_check_branch
          %1488 = sbr.rel (%p1486) target = $region84
        $region83: #{nn_pca_forward.1} parent=79 // pred_region
          %s1489 = sand.u32 %s316, 1
          %s1490 = scalar_lea.sflag [#allocation4], %s1489
          %s1491 = sand.u32 %s316, 1
          %s1492 = scalar_lea.vmem [#allocation3], %s1491
          %1494 = dma.done %s1490, 16
        $region84: #{nn_pca_forward.1} parent=79 // pred_fallthru
          _
      $region80: #{nn_pca_forward.1} parent=5 // pred_fallthru
        _
    $region6: #{nn_pca_forward.1} parent=1 // loop_footer
      %s28 = sadd.s32 1, %s24
    $region7: #{nn_pca_forward.1} parent=1 // loop_footer_branch
      %23 = sbr.rel target = $region3
    $region8: #{nn_pca_forward.1} parent=1 // loop_exit
      _
    %1495 = vsyncpa [#allocation4], 1
    %s1496 = scalar_lea.sflag [#allocation4], 1
    %1497 = vsyncpa %s1496, 1

</llo_original>
